<compile_context>
chip_gen: v7x
topology: tpu7x:2x2x1
jax: 0.10.0
libtpu: 0.0.40
codegen_flags: <defaults>
</compile_context>

<pallas_src>
import functools

import jax
import jax.numpy as jnp
from jax.experimental import pallas as pl
from jax.experimental.pallas import tpu as pltpu

NUM_CLASSES = 8
C_HALF = 384 + 384 + 128 + 128          # 1024 per-stream I3D feature channels
C_FEAT = 2 * C_HALF                     # 2048 after concat
HIDDEN = 256
K_OUT = NUM_CLASSES + 4                 # 12
BN_EPS = 1e-3


def _predictor_kernel(f1_ref, f2_ref, w1a_ref, w1b_ref, shift_ref,
                      w2_ref, b2_ref, mask_ref, out_ref, *, b_per, t):
    """One batch group (b_per clips) per grid step; everything lane-dense.

    f1_ref, f2_ref : (b_per*T, C_HALF) bf16  features, channels on lanes
    w1a / w1b      : (C_HALF, HIDDEN) bf16   layer-1 weight split per stream,
                                             eval-BN scale pre-folded (f32 fold)
    shift          : (1, HIDDEN) f32         folded eval-BN shift
    w2             : (HIDDEN, K_OUT) f32
    b2, mask       : (1, K_OUT) f32
    out_ref        : (b_per, K_OUT) f32
    """
    # layer1 (1x1x1 conv over a (T,1,1) grid == per-timestep matmul).  Channel
    # concat fused as the sum of two dots against the split weight; bf16
    # operands, f32 accumulation on the MXU.
    h = jnp.dot(f1_ref[...], w1a_ref[...], preferred_element_type=jnp.float32)
    h = h + jnp.dot(f2_ref[...], w1b_ref[...],
                    preferred_element_type=jnp.float32)
    # eval-BN shift (scale already folded into the weights) + ReLU, f32.
    h = jnp.maximum(h + shift_ref[...], 0.0)                     # (rows, HIDDEN)
    # temporal mean hoisted above the (affine) second layer -- mathematically
    # identical to mean(layer2(h)); blocks carry exactly b_per*T real rows so
    # the mean divides by the true T.
    if b_per == 1:
        hm = jnp.mean(h, axis=0, keepdims=True)                  # (1, HIDDEN)
    else:
        hm = jnp.mean(h.reshape(b_per, t, HIDDEN), axis=1)       # (b_per, HIDDEN)
    # layer2: 1x1x1 conv + bias (no BN, no activation).
    y = jnp.dot(hm, w2_ref[...],
                preferred_element_type=jnp.float32) + b2_ref[...]
    # sigmoid only on the start/end columns, selected by a precomputed mask.
    out_ref[...] = y + mask_ref[...] * (jax.nn.sigmoid(y) - y)


def init_params(key):
    k1, k2 = jax.random.split(key)
    # layer1: Conv3d(2048 -> 256, 1x1x1, bias=False), stored as (C, H) so the
    # kernel runs the standard-form lane-dense matmul.
    w1 = jax.random.normal(k1, (C_FEAT, HIDDEN), jnp.float32) * 0.02
    # BatchNorm3d(256, eps=1e-3) default params, folded for eval mode.
    gamma = jnp.ones((HIDDEN,), jnp.float32)
    beta = jnp.zeros((HIDDEN,), jnp.float32)
    run_mean = jnp.zeros((HIDDEN,), jnp.float32)
    run_var = jnp.ones((HIDDEN,), jnp.float32)
    scale = gamma / jnp.sqrt(run_var + BN_EPS)
    shift = (beta - run_mean * scale).reshape(1, HIDDEN)
    # Fold the BN scale into the layer-1 weights in f32 FIRST, then cast to
    # bf16 and split per input stream (MXU-native; halves weight HBM traffic).
    w1_scaled = w1 * scale[None, :]
    w1a = w1_scaled[:C_HALF].astype(jnp.bfloat16)                # (C_HALF, H)
    w1b = w1_scaled[C_HALF:].astype(jnp.bfloat16)                # (C_HALF, H)
    # layer2: Conv3d(256 -> 12, 1x1x1, bias=True), f32.
    w2 = jax.random.normal(k2, (HIDDEN, K_OUT), jnp.float32) * 0.02
    b2 = jnp.zeros((1, K_OUT), jnp.float32)
    # columns NUM_CLASSES / NUM_CLASSES+1 (start, end) get a sigmoid.
    mask = (jnp.zeros((1, K_OUT), jnp.float32)
            .at[0, NUM_CLASSES].set(1.0)
            .at[0, NUM_CLASSES + 1].set(1.0))
    return w1a, w1b, shift, w2, b2, mask


def tal_predictor(feat1, feat2, params, num_groups=None):
    """feat1, feat2: (B, 1024, T, 1, 1) I3D features. Returns preds (B, K_OUT)."""
    w1a, w1b, shift, w2, b2, mask = params
    B, C, T = feat1.shape[0], feat1.shape[1], feat1.shape[2]
    assert C == C_HALF

    # Lane-dense layout: (B, C, T, 1, 1) -> (B*T, C) bf16 so channels sit on
    # the lane axis.  The transpose/cast is a tiny XLA op at these shapes.
    # TODO(synk): have the backbone emit (B, T, C) bf16 directly to drop it.
    def prep(x):
        x = x.reshape(B, C_HALF, T)
        x = jnp.transpose(x, (0, 2, 1))                          # (B, T, C)
        return x.reshape(B * T, C_HALF).astype(jnp.bfloat16)

    f1 = prep(feat1)
    f2 = prep(feat2)

    # Fuse the batch into one grid step (single-TC v5e/v6e), but keep two
    # "parallel" steps when B is even so v7x's two TensorCores split the work.
    if num_groups is None:
        num_groups = 2 if (B >= 2 and B % 2 == 0) else 1
    b_per = B // num_groups
    rows = b_per * T

    kernel = functools.partial(_predictor_kernel, b_per=b_per, t=T)

    out = pl.pallas_call(
        kernel,
        out_shape=jax.ShapeDtypeStruct((num_groups, b_per, K_OUT), jnp.float32),
        grid=(num_groups,),
        in_specs=[
            pl.BlockSpec((rows, C_HALF), lambda g: (g, 0)),
            pl.BlockSpec((rows, C_HALF), lambda g: (g, 0)),
            # Weight / constant blocks use constant index maps so they are
            # DMA'd once per call and stay VMEM-resident across grid steps.
            pl.BlockSpec((C_HALF, HIDDEN), lambda g: (0, 0)),
            pl.BlockSpec((C_HALF, HIDDEN), lambda g: (0, 0)),
            pl.BlockSpec((1, HIDDEN), lambda g: (0, 0)),
            pl.BlockSpec((HIDDEN, K_OUT), lambda g: (0, 0)),
            pl.BlockSpec((1, K_OUT), lambda g: (0, 0)),
            pl.BlockSpec((1, K_OUT), lambda g: (0, 0)),
        ],
        out_specs=pl.BlockSpec((pl.Squeezed(), b_per, K_OUT),
                               lambda g: (g, 0, 0)),
        compiler_params=pltpu.CompilerParams(
            dimension_semantics=("parallel",)),
    )(f1, f2, w1a, w1b, shift, w2, b2, mask)
    # (num_groups, b_per, K_OUT) -> (B, K_OUT); metadata-only reshape.
    return out.reshape(B, K_OUT)


def tal_forward(feat1, feat2, params, labels=None, weight=0.25):
    preds = tal_predictor(feat1, feat2, params)
    class_scores = preds[:, :NUM_CLASSES]
    start_scores = preds[:, NUM_CLASSES]          # already sigmoided in-kernel
    end_scores = preds[:, NUM_CLASSES + 1]        # already sigmoided in-kernel
    rst_scores = preds[:, NUM_CLASSES + 2]
    rend_scores = preds[:, -1]

    if labels is None:
        return class_scores, start_scores, end_scores, rst_scores, rend_scores

    # ---- loss branch (tiny per-batch elementwise math; kept in JAX glue) ----
    class_labels = labels["event_id"]
    start_labels = labels["start"]
    end_labels = labels["end"]
    rst_labels = labels["rst"]
    rend_labels = labels["rend"]

    log_probs = jax.nn.log_softmax(class_scores, axis=-1)
    class_loss = -jnp.mean(
        jnp.take_along_axis(log_probs, class_labels[:, None], axis=1)[:, 0])

    def bce(p, y):
        # NOTE: PyTorch BCELoss clamps log at -100; the 1e-12 clip differs
        # negligibly for non-saturated sigmoid outputs.
        p = jnp.clip(p, 1e-12, 1.0 - 1e-12)
        return -(y * jnp.log(p) + (1.0 - y) * jnp.log(1.0 - p))

    chunk_inclusion_loss = 0.5 * (bce(start_scores, start_labels)
                                  + bce(end_scores, end_labels))

    def smooth_l1(x, y):
        d = jnp.abs(x - y)
        return jnp.where(d < 1.0, 0.5 * d * d, d - 0.5)

    regression_loss = (start_labels * smooth_l1(rst_scores, rst_labels)
                       + end_labels * smooth_l1(rend_scores, rend_labels))
    indicator = (class_labels > 0).astype(class_loss.dtype)
    total_loss = class_loss + weight * jnp.mean(
        indicator * (chunk_inclusion_loss + regression_loss))
    return (total_loss, class_loss, class_scores, start_scores, end_scores,
            rst_scores, rend_scores)


if __name__ == "__main__":
    B, T = 2, 8
    key = jax.random.PRNGKey(0)
    k_par, k_f1, k_f2 = jax.random.split(key, 3)

    params = init_params(k_par)
    # Stand-ins for frozen I3D.extract_features outputs (B, 1024, T, 1, 1).
    feat1 = jax.random.normal(k_f1, (B, C_HALF, T, 1, 1), jnp.float32)
    feat2 = jax.random.normal(k_f2, (B, C_HALF, T, 1, 1), jnp.float32)

    # Inference path (labels=None).
    outs = tal_forward(feat1, feat2, params)
    jax.block_until_ready(outs)

    # Training path with dummy labels.
    labels = {
        "event_id": jnp.array([1, 0], jnp.int32),
        "start": jnp.array([1.0, 0.0], jnp.float32),
        "end": jnp.array([0.0, 1.0], jnp.float32),
        "rst": jnp.array([0.3, 0.7], jnp.float32),
        "rend": jnp.array([0.6, 0.2], jnp.float32),
    }
    outs_loss = tal_forward(feat1, feat2, params, labels=labels)
    jax.block_until_ready(outs_loss)

    print("KERNEL_OK")
</pallas_src>

<mosaic_0001>
module attributes {stable_mosaic.version = 11 : i64} {
  func.func @_predictor_kernel(%arg0: i32, %arg1: memref<8x1024xbf16, #tpu.memory_space<vmem>>, %arg2: memref<8x1024xbf16, #tpu.memory_space<vmem>>, %arg3: memref<1024x256xbf16, #tpu.memory_space<vmem>>, %arg4: memref<1024x256xbf16, #tpu.memory_space<vmem>>, %arg5: memref<1x256xf32, #tpu.memory_space<vmem>>, %arg6: memref<256x12xf32, #tpu.memory_space<vmem>>, %arg7: memref<1x12xf32, #tpu.memory_space<vmem>>, %arg8: memref<1x12xf32, #tpu.memory_space<vmem>>, %arg9: memref<1x1x12xf32, #tpu.memory_space<vmem>>) attributes {dimension_semantics = [#tpu.dimension_semantics<parallel>], iteration_bounds = array<i64: 2>, scalar_prefetch = 0 : i64, scratch_operands = 0 : i64, tpu.core_type = #tpu.core_type<tc>, window_params = [{transform_indices = @transform_0, window_bounds = array<i64: 8, 1024>}, {transform_indices = @transform_1, window_bounds = array<i64: 8, 1024>}, {pipeline_mode = #tpu.pipeline_mode<synchronous>, transform_indices = @transform_2, window_bounds = array<i64: 1024, 256>}, {pipeline_mode = #tpu.pipeline_mode<synchronous>, transform_indices = @transform_3, window_bounds = array<i64: 1024, 256>}, {pipeline_mode = #tpu.pipeline_mode<synchronous>, transform_indices = @transform_4, window_bounds = array<i64: 1, 256>}, {pipeline_mode = #tpu.pipeline_mode<synchronous>, transform_indices = @transform_5, window_bounds = array<i64: 256, 12>}, {pipeline_mode = #tpu.pipeline_mode<synchronous>, transform_indices = @transform_6, window_bounds = array<i64: 1, 12>}, {pipeline_mode = #tpu.pipeline_mode<synchronous>, transform_indices = @transform_7, window_bounds = array<i64: 1, 12>}, {transform_indices = @transform_8, window_bounds = array<i64: 1, 1, 12>}]} {
    %c0 = arith.constant 0 : index
    %c0_0 = arith.constant 0 : index
    %0 = vector.load %arg1[%c0, %c0_0] : memref<8x1024xbf16, #tpu.memory_space<vmem>>, vector<8x1024xbf16>
    %c0_1 = arith.constant 0 : index
    %c0_2 = arith.constant 0 : index
    %1 = vector.load %arg3[%c0_1, %c0_2] : memref<1024x256xbf16, #tpu.memory_space<vmem>>, vector<1024x256xbf16>
    %cst = arith.constant dense<0.000000e+00> : vector<8x256xf32>
    %2 = tpu.matmul %0, %1, %cst {dimension_numbers = #tpu.dot_dimension_numbers<[1], [0], [0], [1], [0, 0, 1, 1], [], []>} : vector<8x1024xbf16>, vector<1024x256xbf16>, vector<8x256xf32> -> vector<8x256xf32>
    %c0_3 = arith.constant 0 : index
    %c0_4 = arith.constant 0 : index
    %3 = vector.load %arg2[%c0_3, %c0_4] : memref<8x1024xbf16, #tpu.memory_space<vmem>>, vector<8x1024xbf16>
    %c0_5 = arith.constant 0 : index
    %c0_6 = arith.constant 0 : index
    %4 = vector.load %arg4[%c0_5, %c0_6] : memref<1024x256xbf16, #tpu.memory_space<vmem>>, vector<1024x256xbf16>
    %cst_7 = arith.constant dense<0.000000e+00> : vector<8x256xf32>
    %5 = tpu.matmul %3, %4, %cst_7 {dimension_numbers = #tpu.dot_dimension_numbers<[1], [0], [0], [1], [0, 0, 1, 1], [], []>} : vector<8x1024xbf16>, vector<1024x256xbf16>, vector<8x256xf32> -> vector<8x256xf32>
    %6 = arith.addf %2, %5 : vector<8x256xf32>
    %c0_8 = arith.constant 0 : index
    %c0_9 = arith.constant 0 : index
    %7 = vector.load %arg5[%c0_8, %c0_9] : memref<1x256xf32, #tpu.memory_space<vmem>>, vector<1x256xf32>
    %8 = vector.broadcast %7 : vector<1x256xf32> to vector<8x256xf32>
    %9 = arith.addf %6, %8 : vector<8x256xf32>
    %cst_10 = arith.constant 0.000000e+00 : f32
    %10 = vector.broadcast %cst_10 : f32 to vector<8x256xf32>
    %11 = arith.maximumf %9, %10 : vector<8x256xf32>
    %cst_11 = arith.constant dense<0.000000e+00> : vector<256xf32>
    %12 = vector.multi_reduction <add>, %11, %cst_11 [0] : vector<8x256xf32> to vector<256xf32>
    %13 = vector.shape_cast %12 : vector<256xf32> to vector<1x256xf32>
    %cst_12 = arith.constant 8.000000e+00 : f32
    %14 = vector.broadcast %cst_12 : f32 to vector<1x256xf32>
    %15 = arith.divf %13, %14 : vector<1x256xf32>
    %c0_13 = arith.constant 0 : index
    %c0_14 = arith.constant 0 : index
    %16 = vector.load %arg6[%c0_13, %c0_14] : memref<256x12xf32, #tpu.memory_space<vmem>>, vector<256x12xf32>
    %cst_15 = arith.constant dense<0.000000e+00> : vector<1x12xf32>
    %17 = tpu.matmul %15, %16, %cst_15 {dimension_numbers = #tpu.dot_dimension_numbers<[1], [0], [0], [1], [0, 0, 1, 1], [], []>} : vector<1x256xf32>, vector<256x12xf32>, vector<1x12xf32> -> vector<1x12xf32>
    %c0_16 = arith.constant 0 : index
    %c0_17 = arith.constant 0 : index
    %18 = vector.load %arg7[%c0_16, %c0_17] : memref<1x12xf32, #tpu.memory_space<vmem>>, vector<1x12xf32>
    %19 = arith.addf %17, %18 : vector<1x12xf32>
    %c0_18 = arith.constant 0 : index
    %c0_19 = arith.constant 0 : index
    %20 = vector.load %arg8[%c0_18, %c0_19] : memref<1x12xf32, #tpu.memory_space<vmem>>, vector<1x12xf32>
    %21 = arith.negf %19 : vector<1x12xf32>
    %22 = math.exp %21 : vector<1x12xf32>
    %cst_20 = arith.constant 1.000000e+00 : f32
    %23 = vector.broadcast %cst_20 : f32 to vector<1x12xf32>
    %24 = arith.addf %23, %22 : vector<1x12xf32>
    %25 = arith.divf %23, %24 : vector<1x12xf32>
    %26 = arith.subf %25, %19 : vector<1x12xf32>
    %27 = arith.mulf %20, %26 : vector<1x12xf32>
    %28 = arith.addf %19, %27 : vector<1x12xf32>
    %c0_21 = arith.constant 0 : index
    %c0_22 = arith.constant 0 : index
    %c0_23 = arith.constant 0 : index
    %29 = vector.load %arg9[%c0_21, %c0_22, %c0_23] : memref<1x1x12xf32, #tpu.memory_space<vmem>>, vector<1x1x12xf32>
    %30 = vector.shape_cast %29 : vector<1x1x12xf32> to vector<1x12xf32>
    %31 = vector.shape_cast %28 : vector<1x12xf32> to vector<1x1x12xf32>
    tpu.vector_store %arg9[%c0_21, %c0_22, %c0_23], %31 {strides = array<i32>} : memref<1x1x12xf32, #tpu.memory_space<vmem>>, vector<1x1x12xf32>,
    return
  }
  func.func @transform_0(%arg0: i32) -> (i32, i32) {
    %c0_i32 = arith.constant 0 : i32
    %c0_i32_0 = arith.constant 0 : i32
    return %arg0, %c0_i32 : i32, i32
  }
  func.func @transform_1(%arg0: i32) -> (i32, i32) {
    %c0_i32 = arith.constant 0 : i32
    %c0_i32_0 = arith.constant 0 : i32
    return %arg0, %c0_i32 : i32, i32
  }
  func.func @transform_2(%arg0: i32) -> (i32, i32) {
    %c0_i32 = arith.constant 0 : i32
    %c0_i32_0 = arith.constant 0 : i32
    %c0_i32_1 = arith.constant 0 : i32
    return %c0_i32, %c0_i32_0 : i32, i32
  }
  func.func @transform_3(%arg0: i32) -> (i32, i32) {
    %c0_i32 = arith.constant 0 : i32
    %c0_i32_0 = arith.constant 0 : i32
    %c0_i32_1 = arith.constant 0 : i32
    return %c0_i32, %c0_i32_0 : i32, i32
  }
  func.func @transform_4(%arg0: i32) -> (i32, i32) {
    %c0_i32 = arith.constant 0 : i32
    %c0_i32_0 = arith.constant 0 : i32
    %c0_i32_1 = arith.constant 0 : i32
    return %c0_i32, %c0_i32_0 : i32, i32
  }
  func.func @transform_5(%arg0: i32) -> (i32, i32) {
    %c0_i32 = arith.constant 0 : i32
    %c0_i32_0 = arith.constant 0 : i32
    %c0_i32_1 = arith.constant 0 : i32
    return %c0_i32, %c0_i32_0 : i32, i32
  }
  func.func @transform_6(%arg0: i32) -> (i32, i32) {
    %c0_i32 = arith.constant 0 : i32
    %c0_i32_0 = arith.constant 0 : i32
    %c0_i32_1 = arith.constant 0 : i32
    return %c0_i32, %c0_i32_0 : i32, i32
  }
  func.func @transform_7(%arg0: i32) -> (i32, i32) {
    %c0_i32 = arith.constant 0 : i32
    %c0_i32_0 = arith.constant 0 : i32
    %c0_i32_1 = arith.constant 0 : i32
    return %c0_i32, %c0_i32_0 : i32, i32
  }
  func.func @transform_8(%arg0: i32) -> (i32, i32, i32) {
    %c0_i32 = arith.constant 0 : i32
    %c0_i32_0 = arith.constant 0 : i32
    %c0_i32_1 = arith.constant 0 : i32
    return %arg0, %c0_i32, %c0_i32_0 : i32, i32, i32
  }
}

</mosaic_0001>

<llo_original>
// kernel: tpu_custom_call.1
$region0: #{tpu_custom_call.1}
  #allocation0 [shape = 'u32[]', space=smem, size = 0x4, offset = 0x4, fixed_abs, tag = 'smem constant byte address 0x4 - core index']
  #allocation1 [shape = 'u32[144,128]{1,0:T(1,128)}', space=vmem, size = 0x12000, scoped, tag = 'internal scratch']
  %s0 = inlined_call_operand.vmem [shape: bf16[16,1024], index: 0, kind: input, shape index: {}]
  %s1 = inlined_call_operand.vmem [shape: bf16[16,1024], index: 1, kind: input, shape index: {}]
  %s2 = inlined_call_operand.hbm [shape: bf16[1024,256], index: 2, kind: input, shape index: {}]
  %s3 = inlined_call_operand.hbm [shape: bf16[1024,256], index: 3, kind: input, shape index: {}]
  %s4 = inlined_call_operand.vmem [shape: f32[1,256], index: 4, kind: input, shape index: {}]
  %s5 = inlined_call_operand.vmem [shape: f32[256,12], index: 5, kind: input, shape index: {}]
  %s6 = inlined_call_operand.vmem [shape: f32[1,12], index: 6, kind: input, shape index: {}]
  %s7 = inlined_call_operand.vmem [shape: f32[1,12], index: 7, kind: input, shape index: {}]
  %s8 = inlined_call_operand.hbm [shape: f32[2,1,12], index: 8, kind: output, shape index: {}]
  %s9 = sld [smem:[#allocation0]]
  $region73: #{tpu_custom_call.1} parent=0
    _
  %s11 = ssub.s32 1, %s9
  %s12 = scalar_select 0, %s11, %s9
  $region1: #{tpu_custom_call.1} parent=0
    #allocation2 [shape = 'u8[524288]{0}', space=vmem, size = 0x80000, scoped, tag = 'input window, operand 2, single buffered']
    #allocation3 [shape = 's32[2]{0}', space=sflag, size = 0x8, scoped, tag = 'scoped memory for tpu_custom_call.1']
    #allocation4 [shape = 's32[2]{0}', space=sflag, size = 0x8, scoped, tag = 'scoped memory for tpu_custom_call.1']
    #allocation5 [shape = 'u8[524288]{0}', space=vmem, size = 0x80000, scoped, tag = 'input window, operand 3, single buffered']
    #allocation6 [shape = 's32[1]{0}', space=sflag, size = 0x4, scoped, tag = 'scoped memory for tpu_custom_call.1']
    #allocation7 [shape = 'u8[1024]{0}', space=vmem, size = 0x400, scoped, tag = 'output window, operand 0']
    %13 = vsyncpa [#allocation3], 0
    %14 = vsyncpa [#allocation6], 0
    %15 = vsyncpa [#allocation4], 0
    %s16 = scalar_lea.sflag [#allocation4], 1
    %17 = vsyncpa %s16, 0
    loop: start=0, step=1, limit=4
    $region2: #{tpu_custom_call.1} parent=1 // loop_pre_header
      _
    $region3: #{tpu_custom_call.1} parent=1 // loop_header
      %s19 = sphi 0, %s23
      %p20 = scmp.ge.s32.totalorder %s19, 4
      %s29 = sphi 0, %s31
      %s32 = sphi 0, %s29
      %s33 = sphi 0, %s32
      %s49 = sphi 0, %s33
      %s55 = sphi 0, %s57
      %s58 = sphi 0, %s55
      %s59 = sphi 0, %s58
      %s75 = sphi 0, %s59
      %s79 = sphi 0, %s79
      %s81 = sphi 0, %s79
      %s82 = sphi 0, %s81
      %s96 = sphi 0, %s82
      %s100 = sphi 0, %s100
      %s102 = sphi 0, %s100
      %s103 = sphi 0, %s102
      %s117 = sphi 0, %s103
      %s121 = sphi 0, %s121
      %s123 = sphi 0, %s121
      %s124 = sphi 0, %s123
      %s138 = sphi 0, %s124
      %s142 = sphi 0, %s142
      %s144 = sphi 0, %s142
      %s145 = sphi 0, %s144
      %s159 = sphi 0, %s145
      %s163 = sphi 0, %s163
      %s165 = sphi 0, %s163
      %s166 = sphi 0, %s165
      %s180 = sphi 0, %s166
      %s184 = sphi 0, %s184
      %s186 = sphi 0, %s184
      %s187 = sphi 0, %s186
      %s201 = sphi 0, %s187
      %s207 = sphi 0, %s209
      %s210 = sphi 0, %s207
      %s211 = sphi 0, %s210
      %s227 = sphi 0, %s211
    $region4: #{tpu_custom_call.1} parent=1 // loop_header_branch
      %22 = sbr.rel (%p20) target = $region8
    $region5: #{tpu_custom_call.1} parent=1 // loop_body
      %s24 = ssub.s32 %s19, 1
      %s25 = ssub.s32 %s19, 2
      %s26 = sadd.s32 %s19, 1
      %s27 = ssub.s32 %s19, %s26
      %p28 = scmp.eq.s32.totalorder %s27, 0
      %s30 = sadd.s32 %s29, 1
      %s31 = scalar_select %p28, %s29, %s30
      %p34 = pneg %p28
      %p35 = scmp.eq.s32.totalorder %s19, 1
      %p36 = por %p34, %p35
      %p37 = scmp.ne.s32.totalorder %s29, %s32
      %p38 = scmp.eq.s32.totalorder %s19, 0
      %p39 = por %p37, %p38
      %p40 = scmp.ne.s32.totalorder %s29, %s32
      %p41 = scmp.eq.s32.totalorder %s24, 1
      %p42 = por %p40, %p41
      %p43 = scmp.ne.s32.totalorder %s32, %s33
      %p44 = scmp.eq.s32.totalorder %s24, 0
      %p45 = por %p43, %p44
      %p46 = scmp.ne.s32.totalorder %s32, %s33
      %p47 = scmp.eq.s32.totalorder %s25, 1
      %p48 = por %p46, %p47
      %p50 = scmp.ne.s32.totalorder %s33, %s49
      %p51 = scmp.eq.s32.totalorder %s25, 0
      %p52 = por %p50, %p51
      %s53 = ssub.s32 %s19, %s26
      %p54 = scmp.eq.s32.totalorder %s53, 0
      %s56 = sadd.s32 %s55, 1
      %s57 = scalar_select %p54, %s55, %s56
      %p60 = pneg %p54
      %p61 = scmp.eq.s32.totalorder %s19, 1
      %p62 = por %p60, %p61
      %p63 = scmp.ne.s32.totalorder %s55, %s58
      %p64 = scmp.eq.s32.totalorder %s19, 0
      %p65 = por %p63, %p64
      %p66 = scmp.ne.s32.totalorder %s55, %s58
      %p67 = scmp.eq.s32.totalorder %s24, 1
      %p68 = por %p66, %p67
      %p69 = scmp.ne.s32.totalorder %s58, %s59
      %p70 = scmp.eq.s32.totalorder %s24, 0
      %p71 = por %p69, %p70
      %p72 = scmp.ne.s32.totalorder %s58, %s59
      %p73 = scmp.eq.s32.totalorder %s25, 1
      %p74 = por %p72, %p73
      %p76 = scmp.ne.s32.totalorder %s59, %s75
      %p77 = scmp.eq.s32.totalorder %s25, 0
      %p78 = por %p76, %p77
      %s80 = sadd.s32 %s79, 1
      %p83 = scmp.eq.s32.totalorder %s19, 1
      %p84 = scmp.ne.s32.totalorder %s79, %s81
      %p85 = scmp.eq.s32.totalorder %s19, 0
      %p86 = por %p84, %p85
      %p87 = scmp.ne.s32.totalorder %s79, %s81
      %p88 = scmp.eq.s32.totalorder %s24, 1
      %p89 = por %p87, %p88
      %p90 = scmp.ne.s32.totalorder %s81, %s82
      %p91 = scmp.eq.s32.totalorder %s24, 0
      %p92 = por %p90, %p91
      %p93 = scmp.ne.s32.totalorder %s81, %s82
      %p94 = scmp.eq.s32.totalorder %s25, 1
      %p95 = por %p93, %p94
      %p97 = scmp.ne.s32.totalorder %s82, %s96
      %p98 = scmp.eq.s32.totalorder %s25, 0
      %p99 = por %p97, %p98
      %s101 = sadd.s32 %s100, 1
      %p104 = scmp.eq.s32.totalorder %s19, 1
      %p105 = scmp.ne.s32.totalorder %s100, %s102
      %p106 = scmp.eq.s32.totalorder %s19, 0
      %p107 = por %p105, %p106
      %p108 = scmp.ne.s32.totalorder %s100, %s102
      %p109 = scmp.eq.s32.totalorder %s24, 1
      %p110 = por %p108, %p109
      %p111 = scmp.ne.s32.totalorder %s102, %s103
      %p112 = scmp.eq.s32.totalorder %s24, 0
      %p113 = por %p111, %p112
      %p114 = scmp.ne.s32.totalorder %s102, %s103
      %p115 = scmp.eq.s32.totalorder %s25, 1
      %p116 = por %p114, %p115
      %p118 = scmp.ne.s32.totalorder %s103, %s117
      %p119 = scmp.eq.s32.totalorder %s25, 0
      %p120 = por %p118, %p119
      %s122 = sadd.s32 %s121, 1
      %p125 = scmp.eq.s32.totalorder %s19, 1
      %p126 = scmp.ne.s32.totalorder %s121, %s123
      %p127 = scmp.eq.s32.totalorder %s19, 0
      %p128 = por %p126, %p127
      %p129 = scmp.ne.s32.totalorder %s121, %s123
      %p130 = scmp.eq.s32.totalorder %s24, 1
      %p131 = por %p129, %p130
      %p132 = scmp.ne.s32.totalorder %s123, %s124
      %p133 = scmp.eq.s32.totalorder %s24, 0
      %p134 = por %p132, %p133
      %p135 = scmp.ne.s32.totalorder %s123, %s124
      %p136 = scmp.eq.s32.totalorder %s25, 1
      %p137 = por %p135, %p136
      %p139 = scmp.ne.s32.totalorder %s124, %s138
      %p140 = scmp.eq.s32.totalorder %s25, 0
      %p141 = por %p139, %p140
      %s143 = sadd.s32 %s142, 1
      %p146 = scmp.eq.s32.totalorder %s19, 1
      %p147 = scmp.ne.s32.totalorder %s142, %s144
      %p148 = scmp.eq.s32.totalorder %s19, 0
      %p149 = por %p147, %p148
      %p150 = scmp.ne.s32.totalorder %s142, %s144
      %p151 = scmp.eq.s32.totalorder %s24, 1
      %p152 = por %p150, %p151
      %p153 = scmp.ne.s32.totalorder %s144, %s145
      %p154 = scmp.eq.s32.totalorder %s24, 0
      %p155 = por %p153, %p154
      %p156 = scmp.ne.s32.totalorder %s144, %s145
      %p157 = scmp.eq.s32.totalorder %s25, 1
      %p158 = por %p156, %p157
      %p160 = scmp.ne.s32.totalorder %s145, %s159
      %p161 = scmp.eq.s32.totalorder %s25, 0
      %p162 = por %p160, %p161
      %s164 = sadd.s32 %s163, 1
      %p167 = scmp.eq.s32.totalorder %s19, 1
      %p168 = scmp.ne.s32.totalorder %s163, %s165
      %p169 = scmp.eq.s32.totalorder %s19, 0
      %p170 = por %p168, %p169
      %p171 = scmp.ne.s32.totalorder %s163, %s165
      %p172 = scmp.eq.s32.totalorder %s24, 1
      %p173 = por %p171, %p172
      %p174 = scmp.ne.s32.totalorder %s165, %s166
      %p175 = scmp.eq.s32.totalorder %s24, 0
      %p176 = por %p174, %p175
      %p177 = scmp.ne.s32.totalorder %s165, %s166
      %p178 = scmp.eq.s32.totalorder %s25, 1
      %p179 = por %p177, %p178
      %p181 = scmp.ne.s32.totalorder %s166, %s180
      %p182 = scmp.eq.s32.totalorder %s25, 0
      %p183 = por %p181, %p182
      %s185 = sadd.s32 %s184, 1
      %p188 = scmp.eq.s32.totalorder %s19, 1
      %p189 = scmp.ne.s32.totalorder %s184, %s186
      %p190 = scmp.eq.s32.totalorder %s19, 0
      %p191 = por %p189, %p190
      %p192 = scmp.ne.s32.totalorder %s184, %s186
      %p193 = scmp.eq.s32.totalorder %s24, 1
      %p194 = por %p192, %p193
      %p195 = scmp.ne.s32.totalorder %s186, %s187
      %p196 = scmp.eq.s32.totalorder %s24, 0
      %p197 = por %p195, %p196
      %p198 = scmp.ne.s32.totalorder %s186, %s187
      %p199 = scmp.eq.s32.totalorder %s25, 1
      %p200 = por %p198, %p199
      %p202 = scmp.ne.s32.totalorder %s187, %s201
      %p203 = scmp.eq.s32.totalorder %s25, 0
      %p204 = por %p202, %p203
      %s205 = ssub.s32 %s19, %s26
      %p206 = scmp.eq.s32.totalorder %s205, 0
      %s208 = sadd.s32 %s207, 1
      %s209 = scalar_select %p206, %s207, %s208
      %p212 = pneg %p206
      %p213 = scmp.eq.s32.totalorder %s19, 1
      %p214 = por %p212, %p213
      %p215 = scmp.ne.s32.totalorder %s207, %s210
      %p216 = scmp.eq.s32.totalorder %s19, 0
      %p217 = por %p215, %p216
      %p218 = scmp.ne.s32.totalorder %s207, %s210
      %p219 = scmp.eq.s32.totalorder %s24, 1
      %p220 = por %p218, %p219
      %p221 = scmp.ne.s32.totalorder %s210, %s211
      %p222 = scmp.eq.s32.totalorder %s24, 0
      %p223 = por %p221, %p222
      %p224 = scmp.ne.s32.totalorder %s210, %s211
      %p225 = scmp.eq.s32.totalorder %s25, 1
      %p226 = por %p224, %p225
      %p228 = scmp.ne.s32.totalorder %s211, %s227
      %p229 = scmp.eq.s32.totalorder %s25, 0
      %p230 = por %p228, %p229
      %p231 = scmp.le.s32.totalorder 1, %s19
      %p232 = scmp.lt.s32.totalorder %s19, 3
      %p233 = pnand %p231, %p232
      %p234 = pneg %p233
      // Predicated region
      $region9: #{tpu_custom_call.1} parent=5 // pred_check
        _
      $region10: #{tpu_custom_call.1} parent=5 // pred_check_branch
        %236 = sbr.rel (%p233) target = $region12
      $region11: #{tpu_custom_call.1} parent=5 // pred_region
        %s237 = ssub.s32 %s19, 1
        // Predicated region
        $region13: #{tpu_custom_call.1} parent=11 // pred_check
          %p238 = pneg %p92
        $region14: #{tpu_custom_call.1} parent=11 // pred_check_branch
          %240 = sbr.rel (%p238) target = $region16
        $region15: #{tpu_custom_call.1} parent=11 // pred_region
          %s242 = ssub.s32 16384, 16384
          %243 = vsyncadd [#allocation3], %s242
          %s244 = sshll.u32 [#allocation2], 4
          %s245 = int_to_ptr.vmem [resolvable:$true] %s244
          %250 = dma.hbm_to_vmem [thread:$0]  %s2, 16384, %s245, [#allocation3], 128, 128, 8
        $region16: #{tpu_custom_call.1} parent=11 // pred_fallthru
          _
        // Predicated region
        $region17: #{tpu_custom_call.1} parent=11 // pred_check
          %p251 = pneg %p113
        $region18: #{tpu_custom_call.1} parent=11 // pred_check_branch
          %253 = sbr.rel (%p251) target = $region20
        $region19: #{tpu_custom_call.1} parent=11 // pred_region
          %s255 = ssub.s32 16384, 16384
          %256 = vsyncadd [#allocation6], %s255
          %s257 = sshll.u32 [#allocation5], 4
          %s258 = int_to_ptr.vmem [resolvable:$true] %s257
          %263 = dma.hbm_to_vmem [thread:$0]  %s3, 16384, %s258, [#allocation6], 128, 128, 8
        $region20: #{tpu_custom_call.1} parent=11 // pred_fallthru
          _
        // Predicated region
        $region21: #{tpu_custom_call.1} parent=11 // pred_check
          %p264 = pneg %p134
        $region22: #{tpu_custom_call.1} parent=11 // pred_check_branch
          %266 = sbr.rel (%p264) target = $region24
        $region23: #{tpu_custom_call.1} parent=11 // pred_region
          _
        $region24: #{tpu_custom_call.1} parent=11 // pred_fallthru
          _
        // Predicated region
        $region25: #{tpu_custom_call.1} parent=11 // pred_check
          %p267 = pneg %p155
        $region26: #{tpu_custom_call.1} parent=11 // pred_check_branch
          %269 = sbr.rel (%p267) target = $region28
        $region27: #{tpu_custom_call.1} parent=11 // pred_region
          _
        $region28: #{tpu_custom_call.1} parent=11 // pred_fallthru
          _
        // Predicated region
        $region29: #{tpu_custom_call.1} parent=11 // pred_check
          %p270 = pneg %p176
        $region30: #{tpu_custom_call.1} parent=11 // pred_check_branch
          %272 = sbr.rel (%p270) target = $region32
        $region31: #{tpu_custom_call.1} parent=11 // pred_region
          _
        $region32: #{tpu_custom_call.1} parent=11 // pred_fallthru
          _
        // Predicated region
        $region33: #{tpu_custom_call.1} parent=11 // pred_check
          %p273 = pneg %p197
        $region34: #{tpu_custom_call.1} parent=11 // pred_check_branch
          %275 = sbr.rel (%p273) target = $region36
        $region35: #{tpu_custom_call.1} parent=11 // pred_region
          _
        $region36: #{tpu_custom_call.1} parent=11 // pred_fallthru
          _
      $region12: #{tpu_custom_call.1} parent=5 // pred_fallthru
        _
      %p276 = scmp.lt.s32.totalorder %s19, 2
      // Predicated region
      $region37: #{tpu_custom_call.1} parent=5 // pred_check
        %p277 = pneg %p276
      $region38: #{tpu_custom_call.1} parent=5 // pred_check_branch
        %279 = sbr.rel (%p277) target = $region40
      $region39: #{tpu_custom_call.1} parent=5 // pred_region
        // Predicated region
        $region41: #{tpu_custom_call.1} parent=39 // pred_check
          %p280 = pneg %p39
        $region42: #{tpu_custom_call.1} parent=39 // pred_check_branch
          %282 = sbr.rel (%p280) target = $region44
        $region43: #{tpu_custom_call.1} parent=39 // pred_region
          %p283 = scmp.lt.s32.totalorder %s19, 1
          %s284 = scalar_select %p283, %s19, 1
          %s285 = smul.addr %s284, 8
          %s286 = smul.addr %s285, 4
          %s287 = scalar_lea.vmem %s0, %s286
        $region44: #{tpu_custom_call.1} parent=39 // pred_fallthru
          _
        // Predicated region
        $region45: #{tpu_custom_call.1} parent=39 // pred_check
          %p288 = pneg %p65
        $region46: #{tpu_custom_call.1} parent=39 // pred_check_branch
          %290 = sbr.rel (%p288) target = $region48
        $region47: #{tpu_custom_call.1} parent=39 // pred_region
          %p291 = scmp.lt.s32.totalorder %s19, 1
          %s292 = scalar_select %p291, %s19, 1
          %s293 = smul.addr %s292, 8
          %s294 = smul.addr %s293, 4
          %s295 = scalar_lea.vmem %s1, %s294
        $region48: #{tpu_custom_call.1} parent=39 // pred_fallthru
          _
      $region40: #{tpu_custom_call.1} parent=5 // pred_fallthru
        _
      %p296 = scmp.le.s32.totalorder 1, %s19
      %p297 = scmp.lt.s32.totalorder %s19, 3
      %p298 = pnand %p296, %p297
      %p299 = pneg %p298
      // Predicated region
      $region49: #{tpu_custom_call.1} parent=5 // pred_check
        _
      $region50: #{tpu_custom_call.1} parent=5 // pred_check_branch
        %301 = sbr.rel (%p298) target = $region52
      $region51: #{tpu_custom_call.1} parent=5 // pred_region
        %s302 = ssub.s32 %s19, 1
        // Predicated region
        $region53: #{tpu_custom_call.1} parent=51 // pred_check
          %p303 = pneg %p92
        $region54: #{tpu_custom_call.1} parent=51 // pred_check_branch
          %305 = sbr.rel (%p303) target = $region56
        $region55: #{tpu_custom_call.1} parent=51 // pred_region
          %306 = dma.done [#allocation3], 16384
        $region56: #{tpu_custom_call.1} parent=51 // pred_fallthru
          _
        // Predicated region
        $region57: #{tpu_custom_call.1} parent=51 // pred_check
          %p307 = pneg %p113
        $region58: #{tpu_custom_call.1} parent=51 // pred_check_branch
          %309 = sbr.rel (%p307) target = $region60
        $region59: #{tpu_custom_call.1} parent=51 // pred_region
          %310 = dma.done [#allocation6], 16384
        $region60: #{tpu_custom_call.1} parent=51 // pred_fallthru
          _
        %p311 = scmp.lt.s32.totalorder %s24, 1
        %s312 = scalar_select %p311, %s24, 1
        %s313 = smul.addr %s312, 8
        %s314 = smul.addr %s313, 4
        %s315 = scalar_lea.vmem %s0, %s314
        %p316 = pneg %p45
        %p317 = pneg %p42
        %p318 = scmp.lt.s32.totalorder %s24, 1
        %s319 = scalar_select %p318, %s24, 1
        %s320 = smul.addr %s319, 8
        %s321 = smul.addr %s320, 4
        %s322 = scalar_lea.vmem %s1, %s321
        %p323 = pneg %p71
        %p324 = pneg %p68
        %p325 = pneg %p92
        %p326 = pneg %p89
        %p327 = pneg %p113
        %p328 = pneg %p110
        %p329 = pneg %p134
        %p330 = pneg %p131
        %p331 = pneg %p155
        %p332 = pneg %p152
        %p333 = pneg %p176
        %p334 = pneg %p173
        %p335 = pneg %p197
        %p336 = pneg %p194
        %p337 = pneg %p223
        %p338 = pneg %p220
        %s339 = sand.u32 %s210, 1
        %s340 = scalar_lea.sflag [#allocation4], %s339
        %s341 = sand.u32 %s210, 1
        %s342 = scalar_lea.vmem [#allocation7], %s341
        %p343 = scmp.lt.s32.totalorder %s24, 1
        %s344 = scalar_select %p343, %s24, 1
        %s345 = smul.addr %s344, 8
        %s346 = smul.addr %s345, 4
        %s347 = scalar_lea.vmem %s0, %s346
        %p348 = scmp.lt.s32.totalorder %s24, 1
        %s349 = scalar_select %p348, %s24, 1
        %s350 = smul.addr %s349, 8
        %s351 = smul.addr %s350, 4
        %s352 = scalar_lea.vmem %s1, %s351
        %v353 = vld [vmem:[%s347] sm:$0xff]
        %v354 = vld [vmem:[%s347 + $0x8] sm:$0xff]
        %v355 = vld [vmem:[%s347 + $0x10] sm:$0xff]
        %v356 = vld [vmem:[%s347 + $0x18] sm:$0xff]
        %v357 = vld [vmem:[#allocation2] sm:$0xff]
        %v358 = vld [vmem:[#allocation2 + $0x8] sm:$0xff]
        %v359 = vld [vmem:[#allocation2 + $0x10] sm:$0xff]
        %v360 = vld [vmem:[#allocation2 + $0x18] sm:$0xff]
        %v361 = vld [vmem:[#allocation2 + $0x20] sm:$0xff]
        %v362 = vld [vmem:[#allocation2 + $0x28] sm:$0xff]
        %v363 = vld [vmem:[#allocation2 + $0x30] sm:$0xff]
        %v364 = vld [vmem:[#allocation2 + $0x38] sm:$0xff]
        %v365 = vld [vmem:[#allocation2 + $0x40] sm:$0xff]
        %v366 = vld [vmem:[#allocation2 + $0x48] sm:$0xff]
        %v367 = vld [vmem:[#allocation2 + $0x50] sm:$0xff]
        %v368 = vld [vmem:[#allocation2 + $0x58] sm:$0xff]
        %v369 = vld [vmem:[#allocation2 + $0x60] sm:$0xff]
        %v370 = vld [vmem:[#allocation2 + $0x68] sm:$0xff]
        %v371 = vld [vmem:[#allocation2 + $0x70] sm:$0xff]
        %v372 = vld [vmem:[#allocation2 + $0x78] sm:$0xff]
        %v373 = vld [vmem:[#allocation2 + $0x80] sm:$0xff]
        %v374 = vld [vmem:[#allocation2 + $0x88] sm:$0xff]
        %v375 = vld [vmem:[#allocation2 + $0x90] sm:$0xff]
        %v376 = vld [vmem:[#allocation2 + $0x98] sm:$0xff]
        %v377 = vld [vmem:[#allocation2 + $0xa0] sm:$0xff]
        %v378 = vld [vmem:[#allocation2 + $0xa8] sm:$0xff]
        %v379 = vld [vmem:[#allocation2 + $0xb0] sm:$0xff]
        %v380 = vld [vmem:[#allocation2 + $0xb8] sm:$0xff]
        %v381 = vld [vmem:[#allocation2 + $0xc0] sm:$0xff]
        %v382 = vld [vmem:[#allocation2 + $0xc8] sm:$0xff]
        %v383 = vld [vmem:[#allocation2 + $0xd0] sm:$0xff]
        %v384 = vld [vmem:[#allocation2 + $0xd8] sm:$0xff]
        %v385 = vld [vmem:[#allocation2 + $0xe0] sm:$0xff]
        %v386 = vld [vmem:[#allocation2 + $0xe8] sm:$0xff]
        %v387 = vld [vmem:[#allocation2 + $0xf0] sm:$0xff]
        %v388 = vld [vmem:[#allocation2 + $0xf8] sm:$0xff]
        %v389 = vld [vmem:[#allocation2 + $0x100] sm:$0xff]
        %v390 = vld [vmem:[#allocation2 + $0x108] sm:$0xff]
        %v391 = vld [vmem:[#allocation2 + $0x110] sm:$0xff]
        %v392 = vld [vmem:[#allocation2 + $0x118] sm:$0xff]
        %v393 = vld [vmem:[#allocation2 + $0x120] sm:$0xff]
        %v394 = vld [vmem:[#allocation2 + $0x128] sm:$0xff]
        %v395 = vld [vmem:[#allocation2 + $0x130] sm:$0xff]
        %v396 = vld [vmem:[#allocation2 + $0x138] sm:$0xff]
        %v397 = vld [vmem:[#allocation2 + $0x140] sm:$0xff]
        %v398 = vld [vmem:[#allocation2 + $0x148] sm:$0xff]
        %v399 = vld [vmem:[#allocation2 + $0x150] sm:$0xff]
        %v400 = vld [vmem:[#allocation2 + $0x158] sm:$0xff]
        %v401 = vld [vmem:[#allocation2 + $0x160] sm:$0xff]
        %v402 = vld [vmem:[#allocation2 + $0x168] sm:$0xff]
        %v403 = vld [vmem:[#allocation2 + $0x170] sm:$0xff]
        %v404 = vld [vmem:[#allocation2 + $0x178] sm:$0xff]
        %v405 = vld [vmem:[#allocation2 + $0x180] sm:$0xff]
        %v406 = vld [vmem:[#allocation2 + $0x188] sm:$0xff]
        %v407 = vld [vmem:[#allocation2 + $0x190] sm:$0xff]
        %v408 = vld [vmem:[#allocation2 + $0x198] sm:$0xff]
        %v409 = vld [vmem:[#allocation2 + $0x1a0] sm:$0xff]
        %v410 = vld [vmem:[#allocation2 + $0x1a8] sm:$0xff]
        %v411 = vld [vmem:[#allocation2 + $0x1b0] sm:$0xff]
        %v412 = vld [vmem:[#allocation2 + $0x1b8] sm:$0xff]
        %v413 = vld [vmem:[#allocation2 + $0x1c0] sm:$0xff]
        %v414 = vld [vmem:[#allocation2 + $0x1c8] sm:$0xff]
        %v415 = vld [vmem:[#allocation2 + $0x1d0] sm:$0xff]
        %v416 = vld [vmem:[#allocation2 + $0x1d8] sm:$0xff]
        %v417 = vld [vmem:[#allocation2 + $0x1e0] sm:$0xff]
        %v418 = vld [vmem:[#allocation2 + $0x1e8] sm:$0xff]
        %v419 = vld [vmem:[#allocation2 + $0x1f0] sm:$0xff]
        %v420 = vld [vmem:[#allocation2 + $0x1f8] sm:$0xff]
        %v421 = vld [vmem:[#allocation2 + $0x200] sm:$0xff]
        %v422 = vld [vmem:[#allocation2 + $0x208] sm:$0xff]
        %v423 = vld [vmem:[#allocation2 + $0x210] sm:$0xff]
        %v424 = vld [vmem:[#allocation2 + $0x218] sm:$0xff]
        %v425 = vld [vmem:[#allocation2 + $0x220] sm:$0xff]
        %v426 = vld [vmem:[#allocation2 + $0x228] sm:$0xff]
        %v427 = vld [vmem:[#allocation2 + $0x230] sm:$0xff]
        %v428 = vld [vmem:[#allocation2 + $0x238] sm:$0xff]
        %v429 = vld [vmem:[#allocation2 + $0x240] sm:$0xff]
        %v430 = vld [vmem:[#allocation2 + $0x248] sm:$0xff]
        %v431 = vld [vmem:[#allocation2 + $0x250] sm:$0xff]
        %v432 = vld [vmem:[#allocation2 + $0x258] sm:$0xff]
        %v433 = vld [vmem:[#allocation2 + $0x260] sm:$0xff]
        %v434 = vld [vmem:[#allocation2 + $0x268] sm:$0xff]
        %v435 = vld [vmem:[#allocation2 + $0x270] sm:$0xff]
        %v436 = vld [vmem:[#allocation2 + $0x278] sm:$0xff]
        %v437 = vld [vmem:[#allocation2 + $0x280] sm:$0xff]
        %v438 = vld [vmem:[#allocation2 + $0x288] sm:$0xff]
        %v439 = vld [vmem:[#allocation2 + $0x290] sm:$0xff]
        %v440 = vld [vmem:[#allocation2 + $0x298] sm:$0xff]
        %v441 = vld [vmem:[#allocation2 + $0x2a0] sm:$0xff]
        %v442 = vld [vmem:[#allocation2 + $0x2a8] sm:$0xff]
        %v443 = vld [vmem:[#allocation2 + $0x2b0] sm:$0xff]
        %v444 = vld [vmem:[#allocation2 + $0x2b8] sm:$0xff]
        %v445 = vld [vmem:[#allocation2 + $0x2c0] sm:$0xff]
        %v446 = vld [vmem:[#allocation2 + $0x2c8] sm:$0xff]
        %v447 = vld [vmem:[#allocation2 + $0x2d0] sm:$0xff]
        %v448 = vld [vmem:[#allocation2 + $0x2d8] sm:$0xff]
        %v449 = vld [vmem:[#allocation2 + $0x2e0] sm:$0xff]
        %v450 = vld [vmem:[#allocation2 + $0x2e8] sm:$0xff]
        %v451 = vld [vmem:[#allocation2 + $0x2f0] sm:$0xff]
        %v452 = vld [vmem:[#allocation2 + $0x2f8] sm:$0xff]
        %v453 = vld [vmem:[#allocation2 + $0x300] sm:$0xff]
        %v454 = vld [vmem:[#allocation2 + $0x308] sm:$0xff]
        %v455 = vld [vmem:[#allocation2 + $0x310] sm:$0xff]
        %v456 = vld [vmem:[#allocation2 + $0x318] sm:$0xff]
        %v457 = vld [vmem:[#allocation2 + $0x320] sm:$0xff]
        %v458 = vld [vmem:[#allocation2 + $0x328] sm:$0xff]
        %v459 = vld [vmem:[#allocation2 + $0x330] sm:$0xff]
        %v460 = vld [vmem:[#allocation2 + $0x338] sm:$0xff]
        %v461 = vld [vmem:[#allocation2 + $0x340] sm:$0xff]
        %v462 = vld [vmem:[#allocation2 + $0x348] sm:$0xff]
        %v463 = vld [vmem:[#allocation2 + $0x350] sm:$0xff]
        %v464 = vld [vmem:[#allocation2 + $0x358] sm:$0xff]
        %v465 = vld [vmem:[#allocation2 + $0x360] sm:$0xff]
        %v466 = vld [vmem:[#allocation2 + $0x368] sm:$0xff]
        %v467 = vld [vmem:[#allocation2 + $0x370] sm:$0xff]
        %v468 = vld [vmem:[#allocation2 + $0x378] sm:$0xff]
        %v469 = vld [vmem:[#allocation2 + $0x380] sm:$0xff]
        %v470 = vld [vmem:[#allocation2 + $0x388] sm:$0xff]
        %v471 = vld [vmem:[#allocation2 + $0x390] sm:$0xff]
        %v472 = vld [vmem:[#allocation2 + $0x398] sm:$0xff]
        %v473 = vld [vmem:[#allocation2 + $0x3a0] sm:$0xff]
        %v474 = vld [vmem:[#allocation2 + $0x3a8] sm:$0xff]
        %v475 = vld [vmem:[#allocation2 + $0x3b0] sm:$0xff]
        %v476 = vld [vmem:[#allocation2 + $0x3b8] sm:$0xff]
        %v477 = vld [vmem:[#allocation2 + $0x3c0] sm:$0xff]
        %v478 = vld [vmem:[#allocation2 + $0x3c8] sm:$0xff]
        %v479 = vld [vmem:[#allocation2 + $0x3d0] sm:$0xff]
        %v480 = vld [vmem:[#allocation2 + $0x3d8] sm:$0xff]
        %v481 = vld [vmem:[#allocation2 + $0x3e0] sm:$0xff]
        %v482 = vld [vmem:[#allocation2 + $0x3e8] sm:$0xff]
        %v483 = vld [vmem:[#allocation2 + $0x3f0] sm:$0xff]
        %v484 = vld [vmem:[#allocation2 + $0x3f8] sm:$0xff]
        %v485 = vld [vmem:[%s352] sm:$0xff]
        %v486 = vld [vmem:[%s352 + $0x8] sm:$0xff]
        %v487 = vld [vmem:[%s352 + $0x10] sm:$0xff]
        %v488 = vld [vmem:[%s352 + $0x18] sm:$0xff]
        %v489 = vld [vmem:[#allocation5] sm:$0xff]
        %v490 = vld [vmem:[#allocation5 + $0x8] sm:$0xff]
        %v491 = vld [vmem:[#allocation5 + $0x10] sm:$0xff]
        %v492 = vld [vmem:[#allocation5 + $0x18] sm:$0xff]
        %v493 = vld [vmem:[#allocation5 + $0x20] sm:$0xff]
        %v494 = vld [vmem:[#allocation5 + $0x28] sm:$0xff]
        %v495 = vld [vmem:[#allocation5 + $0x30] sm:$0xff]
        %v496 = vld [vmem:[#allocation5 + $0x38] sm:$0xff]
        %v497 = vld [vmem:[#allocation5 + $0x40] sm:$0xff]
        %v498 = vld [vmem:[#allocation5 + $0x48] sm:$0xff]
        %v499 = vld [vmem:[#allocation5 + $0x50] sm:$0xff]
        %v500 = vld [vmem:[#allocation5 + $0x58] sm:$0xff]
        %v501 = vld [vmem:[#allocation5 + $0x60] sm:$0xff]
        %v502 = vld [vmem:[#allocation5 + $0x68] sm:$0xff]
        %v503 = vld [vmem:[#allocation5 + $0x70] sm:$0xff]
        %v504 = vld [vmem:[#allocation5 + $0x78] sm:$0xff]
        %v505 = vld [vmem:[#allocation5 + $0x80] sm:$0xff]
        %v506 = vld [vmem:[#allocation5 + $0x88] sm:$0xff]
        %v507 = vld [vmem:[#allocation5 + $0x90] sm:$0xff]
        %v508 = vld [vmem:[#allocation5 + $0x98] sm:$0xff]
        %v509 = vld [vmem:[#allocation5 + $0xa0] sm:$0xff]
        %v510 = vld [vmem:[#allocation5 + $0xa8] sm:$0xff]
        %v511 = vld [vmem:[#allocation5 + $0xb0] sm:$0xff]
        %v512 = vld [vmem:[#allocation5 + $0xb8] sm:$0xff]
        %v513 = vld [vmem:[#allocation5 + $0xc0] sm:$0xff]
        %v514 = vld [vmem:[#allocation5 + $0xc8] sm:$0xff]
        %v515 = vld [vmem:[#allocation5 + $0xd0] sm:$0xff]
        %v516 = vld [vmem:[#allocation5 + $0xd8] sm:$0xff]
        %v517 = vld [vmem:[#allocation5 + $0xe0] sm:$0xff]
        %v518 = vld [vmem:[#allocation5 + $0xe8] sm:$0xff]
        %v519 = vld [vmem:[#allocation5 + $0xf0] sm:$0xff]
        %v520 = vld [vmem:[#allocation5 + $0xf8] sm:$0xff]
        %v521 = vld [vmem:[#allocation5 + $0x100] sm:$0xff]
        %v522 = vld [vmem:[#allocation5 + $0x108] sm:$0xff]
        %v523 = vld [vmem:[#allocation5 + $0x110] sm:$0xff]
        %v524 = vld [vmem:[#allocation5 + $0x118] sm:$0xff]
        %v525 = vld [vmem:[#allocation5 + $0x120] sm:$0xff]
        %v526 = vld [vmem:[#allocation5 + $0x128] sm:$0xff]
        %v527 = vld [vmem:[#allocation5 + $0x130] sm:$0xff]
        %v528 = vld [vmem:[#allocation5 + $0x138] sm:$0xff]
        %v529 = vld [vmem:[#allocation5 + $0x140] sm:$0xff]
        %v530 = vld [vmem:[#allocation5 + $0x148] sm:$0xff]
        %v531 = vld [vmem:[#allocation5 + $0x150] sm:$0xff]
        %v532 = vld [vmem:[#allocation5 + $0x158] sm:$0xff]
        %v533 = vld [vmem:[#allocation5 + $0x160] sm:$0xff]
        %v534 = vld [vmem:[#allocation5 + $0x168] sm:$0xff]
        %v535 = vld [vmem:[#allocation5 + $0x170] sm:$0xff]
        %v536 = vld [vmem:[#allocation5 + $0x178] sm:$0xff]
        %v537 = vld [vmem:[#allocation5 + $0x180] sm:$0xff]
        %v538 = vld [vmem:[#allocation5 + $0x188] sm:$0xff]
        %v539 = vld [vmem:[#allocation5 + $0x190] sm:$0xff]
        %v540 = vld [vmem:[#allocation5 + $0x198] sm:$0xff]
        %v541 = vld [vmem:[#allocation5 + $0x1a0] sm:$0xff]
        %v542 = vld [vmem:[#allocation5 + $0x1a8] sm:$0xff]
        %v543 = vld [vmem:[#allocation5 + $0x1b0] sm:$0xff]
        %v544 = vld [vmem:[#allocation5 + $0x1b8] sm:$0xff]
        %v545 = vld [vmem:[#allocation5 + $0x1c0] sm:$0xff]
        %v546 = vld [vmem:[#allocation5 + $0x1c8] sm:$0xff]
        %v547 = vld [vmem:[#allocation5 + $0x1d0] sm:$0xff]
        %v548 = vld [vmem:[#allocation5 + $0x1d8] sm:$0xff]
        %v549 = vld [vmem:[#allocation5 + $0x1e0] sm:$0xff]
        %v550 = vld [vmem:[#allocation5 + $0x1e8] sm:$0xff]
        %v551 = vld [vmem:[#allocation5 + $0x1f0] sm:$0xff]
        %v552 = vld [vmem:[#allocation5 + $0x1f8] sm:$0xff]
        %v553 = vld [vmem:[#allocation5 + $0x200] sm:$0xff]
        %v554 = vld [vmem:[#allocation5 + $0x208] sm:$0xff]
        %v555 = vld [vmem:[#allocation5 + $0x210] sm:$0xff]
        %v556 = vld [vmem:[#allocation5 + $0x218] sm:$0xff]
        %v557 = vld [vmem:[#allocation5 + $0x220] sm:$0xff]
        %v558 = vld [vmem:[#allocation5 + $0x228] sm:$0xff]
        %v559 = vld [vmem:[#allocation5 + $0x230] sm:$0xff]
        %v560 = vld [vmem:[#allocation5 + $0x238] sm:$0xff]
        %v561 = vld [vmem:[#allocation5 + $0x240] sm:$0xff]
        %v562 = vld [vmem:[#allocation5 + $0x248] sm:$0xff]
        %v563 = vld [vmem:[#allocation5 + $0x250] sm:$0xff]
        %v564 = vld [vmem:[#allocation5 + $0x258] sm:$0xff]
        %v565 = vld [vmem:[#allocation5 + $0x260] sm:$0xff]
        %v566 = vld [vmem:[#allocation5 + $0x268] sm:$0xff]
        %v567 = vld [vmem:[#allocation5 + $0x270] sm:$0xff]
        %v568 = vld [vmem:[#allocation5 + $0x278] sm:$0xff]
        %v569 = vld [vmem:[#allocation5 + $0x280] sm:$0xff]
        %v570 = vld [vmem:[#allocation5 + $0x288] sm:$0xff]
        %v571 = vld [vmem:[#allocation5 + $0x290] sm:$0xff]
        %v572 = vld [vmem:[#allocation5 + $0x298] sm:$0xff]
        %v573 = vld [vmem:[#allocation5 + $0x2a0] sm:$0xff]
        %v574 = vld [vmem:[#allocation5 + $0x2a8] sm:$0xff]
        %v575 = vld [vmem:[#allocation5 + $0x2b0] sm:$0xff]
        %v576 = vld [vmem:[#allocation5 + $0x2b8] sm:$0xff]
        %v577 = vld [vmem:[#allocation5 + $0x2c0] sm:$0xff]
        %v578 = vld [vmem:[#allocation5 + $0x2c8] sm:$0xff]
        %v579 = vld [vmem:[#allocation5 + $0x2d0] sm:$0xff]
        %v580 = vld [vmem:[#allocation5 + $0x2d8] sm:$0xff]
        %v581 = vld [vmem:[#allocation5 + $0x2e0] sm:$0xff]
        %v582 = vld [vmem:[#allocation5 + $0x2e8] sm:$0xff]
        %v583 = vld [vmem:[#allocation5 + $0x2f0] sm:$0xff]
        %v584 = vld [vmem:[#allocation5 + $0x2f8] sm:$0xff]
        %v585 = vld [vmem:[#allocation5 + $0x300] sm:$0xff]
        %v586 = vld [vmem:[#allocation5 + $0x308] sm:$0xff]
        %v587 = vld [vmem:[#allocation5 + $0x310] sm:$0xff]
        %v588 = vld [vmem:[#allocation5 + $0x318] sm:$0xff]
        %v589 = vld [vmem:[#allocation5 + $0x320] sm:$0xff]
        %v590 = vld [vmem:[#allocation5 + $0x328] sm:$0xff]
        %v591 = vld [vmem:[#allocation5 + $0x330] sm:$0xff]
        %v592 = vld [vmem:[#allocation5 + $0x338] sm:$0xff]
        %v593 = vld [vmem:[#allocation5 + $0x340] sm:$0xff]
        %v594 = vld [vmem:[#allocation5 + $0x348] sm:$0xff]
        %v595 = vld [vmem:[#allocation5 + $0x350] sm:$0xff]
        %v596 = vld [vmem:[#allocation5 + $0x358] sm:$0xff]
        %v597 = vld [vmem:[#allocation5 + $0x360] sm:$0xff]
        %v598 = vld [vmem:[#allocation5 + $0x368] sm:$0xff]
        %v599 = vld [vmem:[#allocation5 + $0x370] sm:$0xff]
        %v600 = vld [vmem:[#allocation5 + $0x378] sm:$0xff]
        %v601 = vld [vmem:[#allocation5 + $0x380] sm:$0xff]
        %v602 = vld [vmem:[#allocation5 + $0x388] sm:$0xff]
        %v603 = vld [vmem:[#allocation5 + $0x390] sm:$0xff]
        %v604 = vld [vmem:[#allocation5 + $0x398] sm:$0xff]
        %v605 = vld [vmem:[#allocation5 + $0x3a0] sm:$0xff]
        %v606 = vld [vmem:[#allocation5 + $0x3a8] sm:$0xff]
        %v607 = vld [vmem:[#allocation5 + $0x3b0] sm:$0xff]
        %v608 = vld [vmem:[#allocation5 + $0x3b8] sm:$0xff]
        %v609 = vld [vmem:[#allocation5 + $0x3c0] sm:$0xff]
        %v610 = vld [vmem:[#allocation5 + $0x3c8] sm:$0xff]
        %v611 = vld [vmem:[#allocation5 + $0x3d0] sm:$0xff]
        %v612 = vld [vmem:[#allocation5 + $0x3d8] sm:$0xff]
        %v613 = vld [vmem:[#allocation5 + $0x3e0] sm:$0xff]
        %v614 = vld [vmem:[#allocation5 + $0x3e8] sm:$0xff]
        %v615 = vld [vmem:[#allocation5 + $0x3f0] sm:$0xff]
        %v616 = vld [vmem:[#allocation5 + $0x3f8] sm:$0xff]
        %v621 = vunpack.c.l.b16 %v485
        %v622 = vunpack.c.h.b16 %v485
        %v623 = vunpack.c.l.b16 %v486
        %v624 = vunpack.c.h.b16 %v486
        %v625 = vunpack.c.l.b16 %v487
        %v626 = vunpack.c.h.b16 %v487
        %v627 = vunpack.c.l.b16 %v488
        %v628 = vunpack.c.h.b16 %v488
        %v629 = vpack.c.b16 %v621, %v621
        %v630 = vpack.c.b16 %v622, %v622
        %v631 = vpack.c.b16 %v623, %v623
        %v632 = vpack.c.b16 %v624, %v624
        %v633 = vpack.c.b16 %v625, %v625
        %v634 = vpack.c.b16 %v626, %v626
        %v635 = vpack.c.b16 %v627, %v627
        %v636 = vpack.c.b16 %v628, %v628
        %v773 = vunpack.c.l.b16 %v489
        %v774 = vunpack.c.h.b16 %v489
        %v775 = vunpack.c.l.b16 %v490
        %v776 = vunpack.c.h.b16 %v490
        %v777 = vunpack.c.l.b16 %v491
        %v778 = vunpack.c.h.b16 %v491
        %v779 = vunpack.c.l.b16 %v492
        %v780 = vunpack.c.h.b16 %v492
        %v781 = vunpack.c.l.b16 %v493
        %v782 = vunpack.c.h.b16 %v493
        %v783 = vunpack.c.l.b16 %v494
        %v784 = vunpack.c.h.b16 %v494
        %v785 = vunpack.c.l.b16 %v495
        %v786 = vunpack.c.h.b16 %v495
        %v787 = vunpack.c.l.b16 %v496
        %v788 = vunpack.c.h.b16 %v496
        %v789 = vunpack.c.l.b16 %v497
        %v790 = vunpack.c.h.b16 %v497
        %v791 = vunpack.c.l.b16 %v498
        %v792 = vunpack.c.h.b16 %v498
        %v793 = vunpack.c.l.b16 %v499
        %v794 = vunpack.c.h.b16 %v499
        %v795 = vunpack.c.l.b16 %v500
        %v796 = vunpack.c.h.b16 %v500
        %v797 = vunpack.c.l.b16 %v501
        %v798 = vunpack.c.h.b16 %v501
        %v799 = vunpack.c.l.b16 %v502
        %v800 = vunpack.c.h.b16 %v502
        %v801 = vunpack.c.l.b16 %v503
        %v802 = vunpack.c.h.b16 %v503
        %v803 = vunpack.c.l.b16 %v504
        %v804 = vunpack.c.h.b16 %v504
        %v805 = vunpack.c.l.b16 %v505
        %v806 = vunpack.c.h.b16 %v505
        %v807 = vunpack.c.l.b16 %v506
        %v808 = vunpack.c.h.b16 %v506
        %v809 = vunpack.c.l.b16 %v507
        %v810 = vunpack.c.h.b16 %v507
        %v811 = vunpack.c.l.b16 %v508
        %v812 = vunpack.c.h.b16 %v508
        %v813 = vunpack.c.l.b16 %v509
        %v814 = vunpack.c.h.b16 %v509
        %v815 = vunpack.c.l.b16 %v510
        %v816 = vunpack.c.h.b16 %v510
        %v817 = vunpack.c.l.b16 %v511
        %v818 = vunpack.c.h.b16 %v511
        %v819 = vunpack.c.l.b16 %v512
        %v820 = vunpack.c.h.b16 %v512
        %v821 = vunpack.c.l.b16 %v513
        %v822 = vunpack.c.h.b16 %v513
        %v823 = vunpack.c.l.b16 %v514
        %v824 = vunpack.c.h.b16 %v514
        %v825 = vunpack.c.l.b16 %v515
        %v826 = vunpack.c.h.b16 %v515
        %v827 = vunpack.c.l.b16 %v516
        %v828 = vunpack.c.h.b16 %v516
        %v829 = vunpack.c.l.b16 %v517
        %v830 = vunpack.c.h.b16 %v517
        %v831 = vunpack.c.l.b16 %v518
        %v832 = vunpack.c.h.b16 %v518
        %v833 = vunpack.c.l.b16 %v519
        %v834 = vunpack.c.h.b16 %v519
        %v835 = vunpack.c.l.b16 %v520
        %v836 = vunpack.c.h.b16 %v520
        %v837 = vunpack.c.l.b16 %v521
        %v838 = vunpack.c.h.b16 %v521
        %v839 = vunpack.c.l.b16 %v522
        %v840 = vunpack.c.h.b16 %v522
        %v841 = vunpack.c.l.b16 %v523
        %v842 = vunpack.c.h.b16 %v523
        %v843 = vunpack.c.l.b16 %v524
        %v844 = vunpack.c.h.b16 %v524
        %v845 = vunpack.c.l.b16 %v525
        %v846 = vunpack.c.h.b16 %v525
        %v847 = vunpack.c.l.b16 %v526
        %v848 = vunpack.c.h.b16 %v526
        %v849 = vunpack.c.l.b16 %v527
        %v850 = vunpack.c.h.b16 %v527
        %v851 = vunpack.c.l.b16 %v528
        %v852 = vunpack.c.h.b16 %v528
        %v853 = vunpack.c.l.b16 %v529
        %v854 = vunpack.c.h.b16 %v529
        %v855 = vunpack.c.l.b16 %v530
        %v856 = vunpack.c.h.b16 %v530
        %v857 = vunpack.c.l.b16 %v531
        %v858 = vunpack.c.h.b16 %v531
        %v859 = vunpack.c.l.b16 %v532
        %v860 = vunpack.c.h.b16 %v532
        %v861 = vunpack.c.l.b16 %v533
        %v862 = vunpack.c.h.b16 %v533
        %v863 = vunpack.c.l.b16 %v534
        %v864 = vunpack.c.h.b16 %v534
        %v865 = vunpack.c.l.b16 %v535
        %v866 = vunpack.c.h.b16 %v535
        %v867 = vunpack.c.l.b16 %v536
        %v868 = vunpack.c.h.b16 %v536
        %v869 = vunpack.c.l.b16 %v537
        %v870 = vunpack.c.h.b16 %v537
        %v871 = vunpack.c.l.b16 %v538
        %v872 = vunpack.c.h.b16 %v538
        %v873 = vunpack.c.l.b16 %v539
        %v874 = vunpack.c.h.b16 %v539
        %v875 = vunpack.c.l.b16 %v540
        %v876 = vunpack.c.h.b16 %v540
        %v877 = vunpack.c.l.b16 %v541
        %v878 = vunpack.c.h.b16 %v541
        %v879 = vunpack.c.l.b16 %v542
        %v880 = vunpack.c.h.b16 %v542
        %v881 = vunpack.c.l.b16 %v543
        %v882 = vunpack.c.h.b16 %v543
        %v883 = vunpack.c.l.b16 %v544
        %v884 = vunpack.c.h.b16 %v544
        %v885 = vunpack.c.l.b16 %v545
        %v886 = vunpack.c.h.b16 %v545
        %v887 = vunpack.c.l.b16 %v546
        %v888 = vunpack.c.h.b16 %v546
        %v889 = vunpack.c.l.b16 %v547
        %v890 = vunpack.c.h.b16 %v547
        %v891 = vunpack.c.l.b16 %v548
        %v892 = vunpack.c.h.b16 %v548
        %v893 = vunpack.c.l.b16 %v549
        %v894 = vunpack.c.h.b16 %v549
        %v895 = vunpack.c.l.b16 %v550
        %v896 = vunpack.c.h.b16 %v550
        %v897 = vunpack.c.l.b16 %v551
        %v898 = vunpack.c.h.b16 %v551
        %v899 = vunpack.c.l.b16 %v552
        %v900 = vunpack.c.h.b16 %v552
        %v901 = vunpack.c.l.b16 %v553
        %v902 = vunpack.c.h.b16 %v553
        %v903 = vunpack.c.l.b16 %v554
        %v904 = vunpack.c.h.b16 %v554
        %v905 = vunpack.c.l.b16 %v555
        %v906 = vunpack.c.h.b16 %v555
        %v907 = vunpack.c.l.b16 %v556
        %v908 = vunpack.c.h.b16 %v556
        %v909 = vunpack.c.l.b16 %v557
        %v910 = vunpack.c.h.b16 %v557
        %v911 = vunpack.c.l.b16 %v558
        %v912 = vunpack.c.h.b16 %v558
        %v913 = vunpack.c.l.b16 %v559
        %v914 = vunpack.c.h.b16 %v559
        %v915 = vunpack.c.l.b16 %v560
        %v916 = vunpack.c.h.b16 %v560
        %v917 = vunpack.c.l.b16 %v561
        %v918 = vunpack.c.h.b16 %v561
        %v919 = vunpack.c.l.b16 %v562
        %v920 = vunpack.c.h.b16 %v562
        %v921 = vunpack.c.l.b16 %v563
        %v922 = vunpack.c.h.b16 %v563
        %v923 = vunpack.c.l.b16 %v564
        %v924 = vunpack.c.h.b16 %v564
        %v925 = vunpack.c.l.b16 %v565
        %v926 = vunpack.c.h.b16 %v565
        %v927 = vunpack.c.l.b16 %v566
        %v928 = vunpack.c.h.b16 %v566
        %v929 = vunpack.c.l.b16 %v567
        %v930 = vunpack.c.h.b16 %v567
        %v931 = vunpack.c.l.b16 %v568
        %v932 = vunpack.c.h.b16 %v568
        %v933 = vunpack.c.l.b16 %v569
        %v934 = vunpack.c.h.b16 %v569
        %v935 = vunpack.c.l.b16 %v570
        %v936 = vunpack.c.h.b16 %v570
        %v937 = vunpack.c.l.b16 %v571
        %v938 = vunpack.c.h.b16 %v571
        %v939 = vunpack.c.l.b16 %v572
        %v940 = vunpack.c.h.b16 %v572
        %v941 = vunpack.c.l.b16 %v573
        %v942 = vunpack.c.h.b16 %v573
        %v943 = vunpack.c.l.b16 %v574
        %v944 = vunpack.c.h.b16 %v574
        %v945 = vunpack.c.l.b16 %v575
        %v946 = vunpack.c.h.b16 %v575
        %v947 = vunpack.c.l.b16 %v576
        %v948 = vunpack.c.h.b16 %v576
        %v949 = vunpack.c.l.b16 %v577
        %v950 = vunpack.c.h.b16 %v577
        %v951 = vunpack.c.l.b16 %v578
        %v952 = vunpack.c.h.b16 %v578
        %v953 = vunpack.c.l.b16 %v579
        %v954 = vunpack.c.h.b16 %v579
        %v955 = vunpack.c.l.b16 %v580
        %v956 = vunpack.c.h.b16 %v580
        %v957 = vunpack.c.l.b16 %v581
        %v958 = vunpack.c.h.b16 %v581
        %v959 = vunpack.c.l.b16 %v582
        %v960 = vunpack.c.h.b16 %v582
        %v961 = vunpack.c.l.b16 %v583
        %v962 = vunpack.c.h.b16 %v583
        %v963 = vunpack.c.l.b16 %v584
        %v964 = vunpack.c.h.b16 %v584
        %v965 = vunpack.c.l.b16 %v585
        %v966 = vunpack.c.h.b16 %v585
        %v967 = vunpack.c.l.b16 %v586
        %v968 = vunpack.c.h.b16 %v586
        %v969 = vunpack.c.l.b16 %v587
        %v970 = vunpack.c.h.b16 %v587
        %v971 = vunpack.c.l.b16 %v588
        %v972 = vunpack.c.h.b16 %v588
        %v973 = vunpack.c.l.b16 %v589
        %v974 = vunpack.c.h.b16 %v589
        %v975 = vunpack.c.l.b16 %v590
        %v976 = vunpack.c.h.b16 %v590
        %v977 = vunpack.c.l.b16 %v591
        %v978 = vunpack.c.h.b16 %v591
        %v979 = vunpack.c.l.b16 %v592
        %v980 = vunpack.c.h.b16 %v592
        %v981 = vunpack.c.l.b16 %v593
        %v982 = vunpack.c.h.b16 %v593
        %v983 = vunpack.c.l.b16 %v594
        %v984 = vunpack.c.h.b16 %v594
        %v985 = vunpack.c.l.b16 %v595
        %v986 = vunpack.c.h.b16 %v595
        %v987 = vunpack.c.l.b16 %v596
        %v988 = vunpack.c.h.b16 %v596
        %v989 = vunpack.c.l.b16 %v597
        %v990 = vunpack.c.h.b16 %v597
        %v991 = vunpack.c.l.b16 %v598
        %v992 = vunpack.c.h.b16 %v598
        %v993 = vunpack.c.l.b16 %v599
        %v994 = vunpack.c.h.b16 %v599
        %v995 = vunpack.c.l.b16 %v600
        %v996 = vunpack.c.h.b16 %v600
        %v997 = vunpack.c.l.b16 %v601
        %v998 = vunpack.c.h.b16 %v601
        %v999 = vunpack.c.l.b16 %v602
        %v1000 = vunpack.c.h.b16 %v602
        %v1001 = vunpack.c.l.b16 %v603
        %v1002 = vunpack.c.h.b16 %v603
        %v1003 = vunpack.c.l.b16 %v604
        %v1004 = vunpack.c.h.b16 %v604
        %v1005 = vunpack.c.l.b16 %v605
        %v1006 = vunpack.c.h.b16 %v605
        %v1007 = vunpack.c.l.b16 %v606
        %v1008 = vunpack.c.h.b16 %v606
        %v1009 = vunpack.c.l.b16 %v607
        %v1010 = vunpack.c.h.b16 %v607
        %v1011 = vunpack.c.l.b16 %v608
        %v1012 = vunpack.c.h.b16 %v608
        %v1013 = vunpack.c.l.b16 %v609
        %v1014 = vunpack.c.h.b16 %v609
        %v1015 = vunpack.c.l.b16 %v610
        %v1016 = vunpack.c.h.b16 %v610
        %v1017 = vunpack.c.l.b16 %v611
        %v1018 = vunpack.c.h.b16 %v611
        %v1019 = vunpack.c.l.b16 %v612
        %v1020 = vunpack.c.h.b16 %v612
        %v1021 = vunpack.c.l.b16 %v613
        %v1022 = vunpack.c.h.b16 %v613
        %v1023 = vunpack.c.l.b16 %v614
        %v1024 = vunpack.c.h.b16 %v614
        %v1025 = vunpack.c.l.b16 %v615
        %v1026 = vunpack.c.h.b16 %v615
        %v1027 = vunpack.c.l.b16 %v616
        %v1028 = vunpack.c.h.b16 %v616
        %v1029 = vpack.c.b16 %v775, %v773
        %v1030 = vpack.c.b16 %v776, %v774
        %v1031 = vpack.c.b16 %v779, %v777
        %v1032 = vpack.c.b16 %v780, %v778
        %v1033 = vpack.c.b16 %v783, %v781
        %v1034 = vpack.c.b16 %v784, %v782
        %v1035 = vpack.c.b16 %v787, %v785
        %v1036 = vpack.c.b16 %v788, %v786
        %v1037 = vpack.c.b16 %v791, %v789
        %v1038 = vpack.c.b16 %v792, %v790
        %v1039 = vpack.c.b16 %v795, %v793
        %v1040 = vpack.c.b16 %v796, %v794
        %v1041 = vpack.c.b16 %v799, %v797
        %v1042 = vpack.c.b16 %v800, %v798
        %v1043 = vpack.c.b16 %v803, %v801
        %v1044 = vpack.c.b16 %v804, %v802
        %v1045 = vpack.c.b16 %v807, %v805
        %v1046 = vpack.c.b16 %v808, %v806
        %v1047 = vpack.c.b16 %v811, %v809
        %v1048 = vpack.c.b16 %v812, %v810
        %v1049 = vpack.c.b16 %v815, %v813
        %v1050 = vpack.c.b16 %v816, %v814
        %v1051 = vpack.c.b16 %v819, %v817
        %v1052 = vpack.c.b16 %v820, %v818
        %v1053 = vpack.c.b16 %v823, %v821
        %v1054 = vpack.c.b16 %v824, %v822
        %v1055 = vpack.c.b16 %v827, %v825
        %v1056 = vpack.c.b16 %v828, %v826
        %v1057 = vpack.c.b16 %v831, %v829
        %v1058 = vpack.c.b16 %v832, %v830
        %v1059 = vpack.c.b16 %v835, %v833
        %v1060 = vpack.c.b16 %v836, %v834
        %v1061 = vpack.c.b16 %v839, %v837
        %v1062 = vpack.c.b16 %v840, %v838
        %v1063 = vpack.c.b16 %v843, %v841
        %v1064 = vpack.c.b16 %v844, %v842
        %v1065 = vpack.c.b16 %v847, %v845
        %v1066 = vpack.c.b16 %v848, %v846
        %v1067 = vpack.c.b16 %v851, %v849
        %v1068 = vpack.c.b16 %v852, %v850
        %v1069 = vpack.c.b16 %v855, %v853
        %v1070 = vpack.c.b16 %v856, %v854
        %v1071 = vpack.c.b16 %v859, %v857
        %v1072 = vpack.c.b16 %v860, %v858
        %v1073 = vpack.c.b16 %v863, %v861
        %v1074 = vpack.c.b16 %v864, %v862
        %v1075 = vpack.c.b16 %v867, %v865
        %v1076 = vpack.c.b16 %v868, %v866
        %v1077 = vpack.c.b16 %v871, %v869
        %v1078 = vpack.c.b16 %v872, %v870
        %v1079 = vpack.c.b16 %v875, %v873
        %v1080 = vpack.c.b16 %v876, %v874
        %v1081 = vpack.c.b16 %v879, %v877
        %v1082 = vpack.c.b16 %v880, %v878
        %v1083 = vpack.c.b16 %v883, %v881
        %v1084 = vpack.c.b16 %v884, %v882
        %v1085 = vpack.c.b16 %v887, %v885
        %v1086 = vpack.c.b16 %v888, %v886
        %v1087 = vpack.c.b16 %v891, %v889
        %v1088 = vpack.c.b16 %v892, %v890
        %v1089 = vpack.c.b16 %v895, %v893
        %v1090 = vpack.c.b16 %v896, %v894
        %v1091 = vpack.c.b16 %v899, %v897
        %v1092 = vpack.c.b16 %v900, %v898
        %v1093 = vpack.c.b16 %v903, %v901
        %v1094 = vpack.c.b16 %v904, %v902
        %v1095 = vpack.c.b16 %v907, %v905
        %v1096 = vpack.c.b16 %v908, %v906
        %v1097 = vpack.c.b16 %v911, %v909
        %v1098 = vpack.c.b16 %v912, %v910
        %v1099 = vpack.c.b16 %v915, %v913
        %v1100 = vpack.c.b16 %v916, %v914
        %v1101 = vpack.c.b16 %v919, %v917
        %v1102 = vpack.c.b16 %v920, %v918
        %v1103 = vpack.c.b16 %v923, %v921
        %v1104 = vpack.c.b16 %v924, %v922
        %v1105 = vpack.c.b16 %v927, %v925
        %v1106 = vpack.c.b16 %v928, %v926
        %v1107 = vpack.c.b16 %v931, %v929
        %v1108 = vpack.c.b16 %v932, %v930
        %v1109 = vpack.c.b16 %v935, %v933
        %v1110 = vpack.c.b16 %v936, %v934
        %v1111 = vpack.c.b16 %v939, %v937
        %v1112 = vpack.c.b16 %v940, %v938
        %v1113 = vpack.c.b16 %v943, %v941
        %v1114 = vpack.c.b16 %v944, %v942
        %v1115 = vpack.c.b16 %v947, %v945
        %v1116 = vpack.c.b16 %v948, %v946
        %v1117 = vpack.c.b16 %v951, %v949
        %v1118 = vpack.c.b16 %v952, %v950
        %v1119 = vpack.c.b16 %v955, %v953
        %v1120 = vpack.c.b16 %v956, %v954
        %v1121 = vpack.c.b16 %v959, %v957
        %v1122 = vpack.c.b16 %v960, %v958
        %v1123 = vpack.c.b16 %v963, %v961
        %v1124 = vpack.c.b16 %v964, %v962
        %v1125 = vpack.c.b16 %v967, %v965
        %v1126 = vpack.c.b16 %v968, %v966
        %v1127 = vpack.c.b16 %v971, %v969
        %v1128 = vpack.c.b16 %v972, %v970
        %v1129 = vpack.c.b16 %v975, %v973
        %v1130 = vpack.c.b16 %v976, %v974
        %v1131 = vpack.c.b16 %v979, %v977
        %v1132 = vpack.c.b16 %v980, %v978
        %v1133 = vpack.c.b16 %v983, %v981
        %v1134 = vpack.c.b16 %v984, %v982
        %v1135 = vpack.c.b16 %v987, %v985
        %v1136 = vpack.c.b16 %v988, %v986
        %v1137 = vpack.c.b16 %v991, %v989
        %v1138 = vpack.c.b16 %v992, %v990
        %v1139 = vpack.c.b16 %v995, %v993
        %v1140 = vpack.c.b16 %v996, %v994
        %v1141 = vpack.c.b16 %v999, %v997
        %v1142 = vpack.c.b16 %v1000, %v998
        %v1143 = vpack.c.b16 %v1003, %v1001
        %v1144 = vpack.c.b16 %v1004, %v1002
        %v1145 = vpack.c.b16 %v1007, %v1005
        %v1146 = vpack.c.b16 %v1008, %v1006
        %v1147 = vpack.c.b16 %v1011, %v1009
        %v1148 = vpack.c.b16 %v1012, %v1010
        %v1149 = vpack.c.b16 %v1015, %v1013
        %v1150 = vpack.c.b16 %v1016, %v1014
        %v1151 = vpack.c.b16 %v1019, %v1017
        %v1152 = vpack.c.b16 %v1020, %v1018
        %v1153 = vpack.c.b16 %v1023, %v1021
        %v1154 = vpack.c.b16 %v1024, %v1022
        %v1155 = vpack.c.b16 %v1027, %v1025
        %v1156 = vpack.c.b16 %v1028, %v1026
        %1285 = vmatprep.subr.bf16.mxu0 %v1030
        %1286 = vmatpush1.bf16.msra.mxu0 %v1029
        %1287 = vmatprep.subr.bf16.mxu0 %v1032
        %1288 = vmatpush1.bf16.msra.mxu0 %v1031
        %1289 = vmatprep.subr.bf16.mxu0 %v1034
        %1290 = vmatpush1.bf16.msra.mxu0 %v1033
        %1291 = vmatprep.subr.bf16.mxu0 %v1036
        %1292 = vmatpush1.bf16.msra.mxu0 %v1035
        %1293 = vmatprep.subr.bf16.mxu0 %v1038
        %1294 = vmatpush1.bf16.msra.mxu0 %v1037
        %1295 = vmatprep.subr.bf16.mxu0 %v1040
        %1296 = vmatpush1.bf16.msra.mxu0 %v1039
        %1297 = vmatprep.subr.bf16.mxu0 %v1042
        %1298 = vmatpush1.bf16.msra.mxu0 %v1041
        %1299 = vmatprep.subr.bf16.mxu0 %v1044
        %1300 = vmatpush1.bf16.msra.mxu0 %v1043
        %1301 = vmatprep.subr.bf16.mxu0 %v1046
        %1302 = vmatpush1.bf16.msra.mxu0 %v1045
        %1303 = vmatprep.subr.bf16.mxu0 %v1048
        %1304 = vmatpush1.bf16.msra.mxu0 %v1047
        %1305 = vmatprep.subr.bf16.mxu0 %v1050
        %1306 = vmatpush1.bf16.msra.mxu0 %v1049
        %1307 = vmatprep.subr.bf16.mxu0 %v1052
        %1308 = vmatpush1.bf16.msra.mxu0 %v1051
        %1309 = vmatprep.subr.bf16.mxu0 %v1054
        %1310 = vmatpush1.bf16.msra.mxu0 %v1053
        %1311 = vmatprep.subr.bf16.mxu0 %v1056
        %1312 = vmatpush1.bf16.msra.mxu0 %v1055
        %1313 = vmatprep.subr.bf16.mxu0 %v1058
        %1314 = vmatpush1.bf16.msra.mxu0 %v1057
        %1315 = vmatprep.subr.bf16.mxu0 %v1060
        %1316 = vmatpush1.bf16.msra.mxu0 %v1059
        %1317 = vmatprep.mubr.bf16.mxu0 %v630
        %1318 = vmatmul.mubr.bf16.gmra.mrb[0].mxu0 %v629
        %v1319 = vpop.f32.mrb[0].mxu0
        %v1320 = vadd.f32 0.0, %v1319
        %v1321 = vpop.f32.mrb[0].mxu0
        %v1322 = vadd.f32 0.0, %v1321
        %v1323 = vpop.f32.mrb[0].mxu0
        %v1324 = vpop.f32.mrb[0].mxu0
        %1325 = vdwg.mxu0
        %1326 = vmatprep.subr.bf16.mxu0 %v1062
        %1327 = vmatpush1.bf16.msra.mxu0 %v1061
        %1328 = vmatprep.subr.bf16.mxu0 %v1064
        %1329 = vmatpush1.bf16.msra.mxu0 %v1063
        %1330 = vmatprep.subr.bf16.mxu0 %v1066
        %1331 = vmatpush1.bf16.msra.mxu0 %v1065
        %1332 = vmatprep.subr.bf16.mxu0 %v1068
        %1333 = vmatpush1.bf16.msra.mxu0 %v1067
        %1334 = vmatprep.subr.bf16.mxu0 %v1070
        %1335 = vmatpush1.bf16.msra.mxu0 %v1069
        %1336 = vmatprep.subr.bf16.mxu0 %v1072
        %1337 = vmatpush1.bf16.msra.mxu0 %v1071
        %1338 = vmatprep.subr.bf16.mxu0 %v1074
        %1339 = vmatpush1.bf16.msra.mxu0 %v1073
        %1340 = vmatprep.subr.bf16.mxu0 %v1076
        %1341 = vmatpush1.bf16.msra.mxu0 %v1075
        %1342 = vmatprep.subr.bf16.mxu0 %v1078
        %1343 = vmatpush1.bf16.msra.mxu0 %v1077
        %1344 = vmatprep.subr.bf16.mxu0 %v1080
        %1345 = vmatpush1.bf16.msra.mxu0 %v1079
        %1346 = vmatprep.subr.bf16.mxu0 %v1082
        %1347 = vmatpush1.bf16.msra.mxu0 %v1081
        %1348 = vmatprep.subr.bf16.mxu0 %v1084
        %1349 = vmatpush1.bf16.msra.mxu0 %v1083
        %1350 = vmatprep.subr.bf16.mxu0 %v1086
        %1351 = vmatpush1.bf16.msra.mxu0 %v1085
        %1352 = vmatprep.subr.bf16.mxu0 %v1088
        %1353 = vmatpush1.bf16.msra.mxu0 %v1087
        %1354 = vmatprep.subr.bf16.mxu0 %v1090
        %1355 = vmatpush1.bf16.msra.mxu0 %v1089
        %1356 = vmatprep.subr.bf16.mxu0 %v1092
        %1357 = vmatpush1.bf16.msra.mxu0 %v1091
        %1358 = vmatprep.mubr.bf16.mxu0 %v632
        %1359 = vmatmul.mubr.bf16.gmra.mrb[0].mxu0 %v631
        %v1360 = vpop.f32.mrb[0].mxu0
        %v1361 = vadd.f32 %v1320, %v1360
        %v1362 = vpop.f32.mrb[0].mxu0
        %v1363 = vadd.f32 %v1322, %v1362
        %v1364 = vpop.f32.mrb[0].mxu0
        %v1365 = vpop.f32.mrb[0].mxu0
        %1366 = vdwg.mxu0
        %1367 = vmatprep.subr.bf16.mxu0 %v1094
        %1368 = vmatpush1.bf16.msra.mxu0 %v1093
        %1369 = vmatprep.subr.bf16.mxu0 %v1096
        %1370 = vmatpush1.bf16.msra.mxu0 %v1095
        %1371 = vmatprep.subr.bf16.mxu0 %v1098
        %1372 = vmatpush1.bf16.msra.mxu0 %v1097
        %1373 = vmatprep.subr.bf16.mxu0 %v1100
        %1374 = vmatpush1.bf16.msra.mxu0 %v1099
        %1375 = vmatprep.subr.bf16.mxu0 %v1102
        %1376 = vmatpush1.bf16.msra.mxu0 %v1101
        %1377 = vmatprep.subr.bf16.mxu0 %v1104
        %1378 = vmatpush1.bf16.msra.mxu0 %v1103
        %1379 = vmatprep.subr.bf16.mxu0 %v1106
        %1380 = vmatpush1.bf16.msra.mxu0 %v1105
        %1381 = vmatprep.subr.bf16.mxu0 %v1108
        %1382 = vmatpush1.bf16.msra.mxu0 %v1107
        %1383 = vmatprep.subr.bf16.mxu0 %v1110
        %1384 = vmatpush1.bf16.msra.mxu0 %v1109
        %1385 = vmatprep.subr.bf16.mxu0 %v1112
        %1386 = vmatpush1.bf16.msra.mxu0 %v1111
        %1387 = vmatprep.subr.bf16.mxu0 %v1114
        %1388 = vmatpush1.bf16.msra.mxu0 %v1113
        %1389 = vmatprep.subr.bf16.mxu0 %v1116
        %1390 = vmatpush1.bf16.msra.mxu0 %v1115
        %1391 = vmatprep.subr.bf16.mxu0 %v1118
        %1392 = vmatpush1.bf16.msra.mxu0 %v1117
        %1393 = vmatprep.subr.bf16.mxu0 %v1120
        %1394 = vmatpush1.bf16.msra.mxu0 %v1119
        %1395 = vmatprep.subr.bf16.mxu0 %v1122
        %1396 = vmatpush1.bf16.msra.mxu0 %v1121
        %1397 = vmatprep.subr.bf16.mxu0 %v1124
        %1398 = vmatpush1.bf16.msra.mxu0 %v1123
        %1399 = vmatprep.mubr.bf16.mxu0 %v634
        %1400 = vmatmul.mubr.bf16.gmra.mrb[0].mxu0 %v633
        %v1401 = vpop.f32.mrb[0].mxu0
        %v1402 = vadd.f32 %v1361, %v1401
        %v1403 = vpop.f32.mrb[0].mxu0
        %v1404 = vadd.f32 %v1363, %v1403
        %v1405 = vpop.f32.mrb[0].mxu0
        %v1406 = vpop.f32.mrb[0].mxu0
        %1407 = vdwg.mxu0
        %1408 = vmatprep.subr.bf16.mxu0 %v1126
        %1409 = vmatpush1.bf16.msra.mxu0 %v1125
        %1410 = vmatprep.subr.bf16.mxu0 %v1128
        %1411 = vmatpush1.bf16.msra.mxu0 %v1127
        %1412 = vmatprep.subr.bf16.mxu0 %v1130
        %1413 = vmatpush1.bf16.msra.mxu0 %v1129
        %1414 = vmatprep.subr.bf16.mxu0 %v1132
        %1415 = vmatpush1.bf16.msra.mxu0 %v1131
        %1416 = vmatprep.subr.bf16.mxu0 %v1134
        %1417 = vmatpush1.bf16.msra.mxu0 %v1133
        %1418 = vmatprep.subr.bf16.mxu0 %v1136
        %1419 = vmatpush1.bf16.msra.mxu0 %v1135
        %1420 = vmatprep.subr.bf16.mxu0 %v1138
        %1421 = vmatpush1.bf16.msra.mxu0 %v1137
        %1422 = vmatprep.subr.bf16.mxu0 %v1140
        %1423 = vmatpush1.bf16.msra.mxu0 %v1139
        %1424 = vmatprep.subr.bf16.mxu0 %v1142
        %1425 = vmatpush1.bf16.msra.mxu0 %v1141
        %1426 = vmatprep.subr.bf16.mxu0 %v1144
        %1427 = vmatpush1.bf16.msra.mxu0 %v1143
        %1428 = vmatprep.subr.bf16.mxu0 %v1146
        %1429 = vmatpush1.bf16.msra.mxu0 %v1145
        %1430 = vmatprep.subr.bf16.mxu0 %v1148
        %1431 = vmatpush1.bf16.msra.mxu0 %v1147
        %1432 = vmatprep.subr.bf16.mxu0 %v1150
        %1433 = vmatpush1.bf16.msra.mxu0 %v1149
        %1434 = vmatprep.subr.bf16.mxu0 %v1152
        %1435 = vmatpush1.bf16.msra.mxu0 %v1151
        %1436 = vmatprep.subr.bf16.mxu0 %v1154
        %1437 = vmatpush1.bf16.msra.mxu0 %v1153
        %1438 = vmatprep.subr.bf16.mxu0 %v1156
        %1439 = vmatpush1.bf16.msra.mxu0 %v1155
        %1440 = vmatprep.mubr.bf16.mxu0 %v636
        %1441 = vmatmul.mubr.bf16.gmra.mrb[0].mxu0 %v635
        %v1442 = vpop.f32.mrb[0].mxu0
        %v1443 = vadd.f32 %v1402, %v1442
        %v1444 = vpop.f32.mrb[0].mxu0
        %v1445 = vadd.f32 %v1404, %v1444
        %v1446 = vpop.f32.mrb[0].mxu0
        %v1447 = vpop.f32.mrb[0].mxu0
        %1448 = vdwg.mxu0
        %v1453 = vunpack.c.l.b16 %v353
        %v1454 = vunpack.c.h.b16 %v353
        %v1455 = vunpack.c.l.b16 %v354
        %v1456 = vunpack.c.h.b16 %v354
        %v1457 = vunpack.c.l.b16 %v355
        %v1458 = vunpack.c.h.b16 %v355
        %v1459 = vunpack.c.l.b16 %v356
        %v1460 = vunpack.c.h.b16 %v356
        %v1461 = vpack.c.b16 %v1453, %v1453
        %v1462 = vpack.c.b16 %v1454, %v1454
        %v1463 = vpack.c.b16 %v1455, %v1455
        %v1464 = vpack.c.b16 %v1456, %v1456
        %v1465 = vpack.c.b16 %v1457, %v1457
        %v1466 = vpack.c.b16 %v1458, %v1458
        %v1467 = vpack.c.b16 %v1459, %v1459
        %v1468 = vpack.c.b16 %v1460, %v1460
        %v1605 = vunpack.c.l.b16 %v357
        %v1606 = vunpack.c.h.b16 %v357
        %v1607 = vunpack.c.l.b16 %v358
        %v1608 = vunpack.c.h.b16 %v358
        %v1609 = vunpack.c.l.b16 %v359
        %v1610 = vunpack.c.h.b16 %v359
        %v1611 = vunpack.c.l.b16 %v360
        %v1612 = vunpack.c.h.b16 %v360
        %v1613 = vunpack.c.l.b16 %v361
        %v1614 = vunpack.c.h.b16 %v361
        %v1615 = vunpack.c.l.b16 %v362
        %v1616 = vunpack.c.h.b16 %v362
        %v1617 = vunpack.c.l.b16 %v363
        %v1618 = vunpack.c.h.b16 %v363
        %v1619 = vunpack.c.l.b16 %v364
        %v1620 = vunpack.c.h.b16 %v364
        %v1621 = vunpack.c.l.b16 %v365
        %v1622 = vunpack.c.h.b16 %v365
        %v1623 = vunpack.c.l.b16 %v366
        %v1624 = vunpack.c.h.b16 %v366
        %v1625 = vunpack.c.l.b16 %v367
        %v1626 = vunpack.c.h.b16 %v367
        %v1627 = vunpack.c.l.b16 %v368
        %v1628 = vunpack.c.h.b16 %v368
        %v1629 = vunpack.c.l.b16 %v369
        %v1630 = vunpack.c.h.b16 %v369
        %v1631 = vunpack.c.l.b16 %v370
        %v1632 = vunpack.c.h.b16 %v370
        %v1633 = vunpack.c.l.b16 %v371
        %v1634 = vunpack.c.h.b16 %v371
        %v1635 = vunpack.c.l.b16 %v372
        %v1636 = vunpack.c.h.b16 %v372
        %v1637 = vunpack.c.l.b16 %v373
        %v1638 = vunpack.c.h.b16 %v373
        %v1639 = vunpack.c.l.b16 %v374
        %v1640 = vunpack.c.h.b16 %v374
        %v1641 = vunpack.c.l.b16 %v375
        %v1642 = vunpack.c.h.b16 %v375
        %v1643 = vunpack.c.l.b16 %v376
        %v1644 = vunpack.c.h.b16 %v376
        %v1645 = vunpack.c.l.b16 %v377
        %v1646 = vunpack.c.h.b16 %v377
        %v1647 = vunpack.c.l.b16 %v378
        %v1648 = vunpack.c.h.b16 %v378
        %v1649 = vunpack.c.l.b16 %v379
        %v1650 = vunpack.c.h.b16 %v379
        %v1651 = vunpack.c.l.b16 %v380
        %v1652 = vunpack.c.h.b16 %v380
        %v1653 = vunpack.c.l.b16 %v381
        %v1654 = vunpack.c.h.b16 %v381
        %v1655 = vunpack.c.l.b16 %v382
        %v1656 = vunpack.c.h.b16 %v382
        %v1657 = vunpack.c.l.b16 %v383
        %v1658 = vunpack.c.h.b16 %v383
        %v1659 = vunpack.c.l.b16 %v384
        %v1660 = vunpack.c.h.b16 %v384
        %v1661 = vunpack.c.l.b16 %v385
        %v1662 = vunpack.c.h.b16 %v385
        %v1663 = vunpack.c.l.b16 %v386
        %v1664 = vunpack.c.h.b16 %v386
        %v1665 = vunpack.c.l.b16 %v387
        %v1666 = vunpack.c.h.b16 %v387
        %v1667 = vunpack.c.l.b16 %v388
        %v1668 = vunpack.c.h.b16 %v388
        %v1669 = vunpack.c.l.b16 %v389
        %v1670 = vunpack.c.h.b16 %v389
        %v1671 = vunpack.c.l.b16 %v390
        %v1672 = vunpack.c.h.b16 %v390
        %v1673 = vunpack.c.l.b16 %v391
        %v1674 = vunpack.c.h.b16 %v391
        %v1675 = vunpack.c.l.b16 %v392
        %v1676 = vunpack.c.h.b16 %v392
        %v1677 = vunpack.c.l.b16 %v393
        %v1678 = vunpack.c.h.b16 %v393
        %v1679 = vunpack.c.l.b16 %v394
        %v1680 = vunpack.c.h.b16 %v394
        %v1681 = vunpack.c.l.b16 %v395
        %v1682 = vunpack.c.h.b16 %v395
        %v1683 = vunpack.c.l.b16 %v396
        %v1684 = vunpack.c.h.b16 %v396
        %v1685 = vunpack.c.l.b16 %v397
        %v1686 = vunpack.c.h.b16 %v397
        %v1687 = vunpack.c.l.b16 %v398
        %v1688 = vunpack.c.h.b16 %v398
        %v1689 = vunpack.c.l.b16 %v399
        %v1690 = vunpack.c.h.b16 %v399
        %v1691 = vunpack.c.l.b16 %v400
        %v1692 = vunpack.c.h.b16 %v400
        %v1693 = vunpack.c.l.b16 %v401
        %v1694 = vunpack.c.h.b16 %v401
        %v1695 = vunpack.c.l.b16 %v402
        %v1696 = vunpack.c.h.b16 %v402
        %v1697 = vunpack.c.l.b16 %v403
        %v1698 = vunpack.c.h.b16 %v403
        %v1699 = vunpack.c.l.b16 %v404
        %v1700 = vunpack.c.h.b16 %v404
        %v1701 = vunpack.c.l.b16 %v405
        %v1702 = vunpack.c.h.b16 %v405
        %v1703 = vunpack.c.l.b16 %v406
        %v1704 = vunpack.c.h.b16 %v406
        %v1705 = vunpack.c.l.b16 %v407
        %v1706 = vunpack.c.h.b16 %v407
        %v1707 = vunpack.c.l.b16 %v408
        %v1708 = vunpack.c.h.b16 %v408
        %v1709 = vunpack.c.l.b16 %v409
        %v1710 = vunpack.c.h.b16 %v409
        %v1711 = vunpack.c.l.b16 %v410
        %v1712 = vunpack.c.h.b16 %v410
        %v1713 = vunpack.c.l.b16 %v411
        %v1714 = vunpack.c.h.b16 %v411
        %v1715 = vunpack.c.l.b16 %v412
        %v1716 = vunpack.c.h.b16 %v412
        %v1717 = vunpack.c.l.b16 %v413
        %v1718 = vunpack.c.h.b16 %v413
        %v1719 = vunpack.c.l.b16 %v414
        %v1720 = vunpack.c.h.b16 %v414
        %v1721 = vunpack.c.l.b16 %v415
        %v1722 = vunpack.c.h.b16 %v415
        %v1723 = vunpack.c.l.b16 %v416
        %v1724 = vunpack.c.h.b16 %v416
        %v1725 = vunpack.c.l.b16 %v417
        %v1726 = vunpack.c.h.b16 %v417
        %v1727 = vunpack.c.l.b16 %v418
        %v1728 = vunpack.c.h.b16 %v418
        %v1729 = vunpack.c.l.b16 %v419
        %v1730 = vunpack.c.h.b16 %v419
        %v1731 = vunpack.c.l.b16 %v420
        %v1732 = vunpack.c.h.b16 %v420
        %v1733 = vunpack.c.l.b16 %v421
        %v1734 = vunpack.c.h.b16 %v421
        %v1735 = vunpack.c.l.b16 %v422
        %v1736 = vunpack.c.h.b16 %v422
        %v1737 = vunpack.c.l.b16 %v423
        %v1738 = vunpack.c.h.b16 %v423
        %v1739 = vunpack.c.l.b16 %v424
        %v1740 = vunpack.c.h.b16 %v424
        %v1741 = vunpack.c.l.b16 %v425
        %v1742 = vunpack.c.h.b16 %v425
        %v1743 = vunpack.c.l.b16 %v426
        %v1744 = vunpack.c.h.b16 %v426
        %v1745 = vunpack.c.l.b16 %v427
        %v1746 = vunpack.c.h.b16 %v427
        %v1747 = vunpack.c.l.b16 %v428
        %v1748 = vunpack.c.h.b16 %v428
        %v1749 = vunpack.c.l.b16 %v429
        %v1750 = vunpack.c.h.b16 %v429
        %v1751 = vunpack.c.l.b16 %v430
        %v1752 = vunpack.c.h.b16 %v430
        %v1753 = vunpack.c.l.b16 %v431
        %v1754 = vunpack.c.h.b16 %v431
        %v1755 = vunpack.c.l.b16 %v432
        %v1756 = vunpack.c.h.b16 %v432
        %v1757 = vunpack.c.l.b16 %v433
        %v1758 = vunpack.c.h.b16 %v433
        %v1759 = vunpack.c.l.b16 %v434
        %v1760 = vunpack.c.h.b16 %v434
        %v1761 = vunpack.c.l.b16 %v435
        %v1762 = vunpack.c.h.b16 %v435
        %v1763 = vunpack.c.l.b16 %v436
        %v1764 = vunpack.c.h.b16 %v436
        %v1765 = vunpack.c.l.b16 %v437
        %v1766 = vunpack.c.h.b16 %v437
        %v1767 = vunpack.c.l.b16 %v438
        %v1768 = vunpack.c.h.b16 %v438
        %v1769 = vunpack.c.l.b16 %v439
        %v1770 = vunpack.c.h.b16 %v439
        %v1771 = vunpack.c.l.b16 %v440
        %v1772 = vunpack.c.h.b16 %v440
        %v1773 = vunpack.c.l.b16 %v441
        %v1774 = vunpack.c.h.b16 %v441
        %v1775 = vunpack.c.l.b16 %v442
        %v1776 = vunpack.c.h.b16 %v442
        %v1777 = vunpack.c.l.b16 %v443
        %v1778 = vunpack.c.h.b16 %v443
        %v1779 = vunpack.c.l.b16 %v444
        %v1780 = vunpack.c.h.b16 %v444
        %v1781 = vunpack.c.l.b16 %v445
        %v1782 = vunpack.c.h.b16 %v445
        %v1783 = vunpack.c.l.b16 %v446
        %v1784 = vunpack.c.h.b16 %v446
        %v1785 = vunpack.c.l.b16 %v447
        %v1786 = vunpack.c.h.b16 %v447
        %v1787 = vunpack.c.l.b16 %v448
        %v1788 = vunpack.c.h.b16 %v448
        %v1789 = vunpack.c.l.b16 %v449
        %v1790 = vunpack.c.h.b16 %v449
        %v1791 = vunpack.c.l.b16 %v450
        %v1792 = vunpack.c.h.b16 %v450
        %v1793 = vunpack.c.l.b16 %v451
        %v1794 = vunpack.c.h.b16 %v451
        %v1795 = vunpack.c.l.b16 %v452
        %v1796 = vunpack.c.h.b16 %v452
        %v1797 = vunpack.c.l.b16 %v453
        %v1798 = vunpack.c.h.b16 %v453
        %v1799 = vunpack.c.l.b16 %v454
        %v1800 = vunpack.c.h.b16 %v454
        %v1801 = vunpack.c.l.b16 %v455
        %v1802 = vunpack.c.h.b16 %v455
        %v1803 = vunpack.c.l.b16 %v456
        %v1804 = vunpack.c.h.b16 %v456
        %v1805 = vunpack.c.l.b16 %v457
        %v1806 = vunpack.c.h.b16 %v457
        %v1807 = vunpack.c.l.b16 %v458
        %v1808 = vunpack.c.h.b16 %v458
        %v1809 = vunpack.c.l.b16 %v459
        %v1810 = vunpack.c.h.b16 %v459
        %v1811 = vunpack.c.l.b16 %v460
        %v1812 = vunpack.c.h.b16 %v460
        %v1813 = vunpack.c.l.b16 %v461
        %v1814 = vunpack.c.h.b16 %v461
        %v1815 = vunpack.c.l.b16 %v462
        %v1816 = vunpack.c.h.b16 %v462
        %v1817 = vunpack.c.l.b16 %v463
        %v1818 = vunpack.c.h.b16 %v463
        %v1819 = vunpack.c.l.b16 %v464
        %v1820 = vunpack.c.h.b16 %v464
        %v1821 = vunpack.c.l.b16 %v465
        %v1822 = vunpack.c.h.b16 %v465
        %v1823 = vunpack.c.l.b16 %v466
        %v1824 = vunpack.c.h.b16 %v466
        %v1825 = vunpack.c.l.b16 %v467
        %v1826 = vunpack.c.h.b16 %v467
        %v1827 = vunpack.c.l.b16 %v468
        %v1828 = vunpack.c.h.b16 %v468
        %v1829 = vunpack.c.l.b16 %v469
        %v1830 = vunpack.c.h.b16 %v469
        %v1831 = vunpack.c.l.b16 %v470
        %v1832 = vunpack.c.h.b16 %v470
        %v1833 = vunpack.c.l.b16 %v471
        %v1834 = vunpack.c.h.b16 %v471
        %v1835 = vunpack.c.l.b16 %v472
        %v1836 = vunpack.c.h.b16 %v472
        %v1837 = vunpack.c.l.b16 %v473
        %v1838 = vunpack.c.h.b16 %v473
        %v1839 = vunpack.c.l.b16 %v474
        %v1840 = vunpack.c.h.b16 %v474
        %v1841 = vunpack.c.l.b16 %v475
        %v1842 = vunpack.c.h.b16 %v475
        %v1843 = vunpack.c.l.b16 %v476
        %v1844 = vunpack.c.h.b16 %v476
        %v1845 = vunpack.c.l.b16 %v477
        %v1846 = vunpack.c.h.b16 %v477
        %v1847 = vunpack.c.l.b16 %v478
        %v1848 = vunpack.c.h.b16 %v478
        %v1849 = vunpack.c.l.b16 %v479
        %v1850 = vunpack.c.h.b16 %v479
        %v1851 = vunpack.c.l.b16 %v480
        %v1852 = vunpack.c.h.b16 %v480
        %v1853 = vunpack.c.l.b16 %v481
        %v1854 = vunpack.c.h.b16 %v481
        %v1855 = vunpack.c.l.b16 %v482
        %v1856 = vunpack.c.h.b16 %v482
        %v1857 = vunpack.c.l.b16 %v483
        %v1858 = vunpack.c.h.b16 %v483
        %v1859 = vunpack.c.l.b16 %v484
        %v1860 = vunpack.c.h.b16 %v484
        %v1861 = vpack.c.b16 %v1607, %v1605
        %v1862 = vpack.c.b16 %v1608, %v1606
        %v1863 = vpack.c.b16 %v1611, %v1609
        %v1864 = vpack.c.b16 %v1612, %v1610
        %v1865 = vpack.c.b16 %v1615, %v1613
        %v1866 = vpack.c.b16 %v1616, %v1614
        %v1867 = vpack.c.b16 %v1619, %v1617
        %v1868 = vpack.c.b16 %v1620, %v1618
        %v1869 = vpack.c.b16 %v1623, %v1621
        %v1870 = vpack.c.b16 %v1624, %v1622
        %v1871 = vpack.c.b16 %v1627, %v1625
        %v1872 = vpack.c.b16 %v1628, %v1626
        %v1873 = vpack.c.b16 %v1631, %v1629
        %v1874 = vpack.c.b16 %v1632, %v1630
        %v1875 = vpack.c.b16 %v1635, %v1633
        %v1876 = vpack.c.b16 %v1636, %v1634
        %v1877 = vpack.c.b16 %v1639, %v1637
        %v1878 = vpack.c.b16 %v1640, %v1638
        %v1879 = vpack.c.b16 %v1643, %v1641
        %v1880 = vpack.c.b16 %v1644, %v1642
        %v1881 = vpack.c.b16 %v1647, %v1645
        %v1882 = vpack.c.b16 %v1648, %v1646
        %v1883 = vpack.c.b16 %v1651, %v1649
        %v1884 = vpack.c.b16 %v1652, %v1650
        %v1885 = vpack.c.b16 %v1655, %v1653
        %v1886 = vpack.c.b16 %v1656, %v1654
        %v1887 = vpack.c.b16 %v1659, %v1657
        %v1888 = vpack.c.b16 %v1660, %v1658
        %v1889 = vpack.c.b16 %v1663, %v1661
        %v1890 = vpack.c.b16 %v1664, %v1662
        %v1891 = vpack.c.b16 %v1667, %v1665
        %v1892 = vpack.c.b16 %v1668, %v1666
        %v1893 = vpack.c.b16 %v1671, %v1669
        %v1894 = vpack.c.b16 %v1672, %v1670
        %v1895 = vpack.c.b16 %v1675, %v1673
        %v1896 = vpack.c.b16 %v1676, %v1674
        %v1897 = vpack.c.b16 %v1679, %v1677
        %v1898 = vpack.c.b16 %v1680, %v1678
        %v1899 = vpack.c.b16 %v1683, %v1681
        %v1900 = vpack.c.b16 %v1684, %v1682
        %v1901 = vpack.c.b16 %v1687, %v1685
        %v1902 = vpack.c.b16 %v1688, %v1686
        %v1903 = vpack.c.b16 %v1691, %v1689
        %v1904 = vpack.c.b16 %v1692, %v1690
        %v1905 = vpack.c.b16 %v1695, %v1693
        %v1906 = vpack.c.b16 %v1696, %v1694
        %v1907 = vpack.c.b16 %v1699, %v1697
        %v1908 = vpack.c.b16 %v1700, %v1698
        %v1909 = vpack.c.b16 %v1703, %v1701
        %v1910 = vpack.c.b16 %v1704, %v1702
        %v1911 = vpack.c.b16 %v1707, %v1705
        %v1912 = vpack.c.b16 %v1708, %v1706
        %v1913 = vpack.c.b16 %v1711, %v1709
        %v1914 = vpack.c.b16 %v1712, %v1710
        %v1915 = vpack.c.b16 %v1715, %v1713
        %v1916 = vpack.c.b16 %v1716, %v1714
        %v1917 = vpack.c.b16 %v1719, %v1717
        %v1918 = vpack.c.b16 %v1720, %v1718
        %v1919 = vpack.c.b16 %v1723, %v1721
        %v1920 = vpack.c.b16 %v1724, %v1722
        %v1921 = vpack.c.b16 %v1727, %v1725
        %v1922 = vpack.c.b16 %v1728, %v1726
        %v1923 = vpack.c.b16 %v1731, %v1729
        %v1924 = vpack.c.b16 %v1732, %v1730
        %v1925 = vpack.c.b16 %v1735, %v1733
        %v1926 = vpack.c.b16 %v1736, %v1734
        %v1927 = vpack.c.b16 %v1739, %v1737
        %v1928 = vpack.c.b16 %v1740, %v1738
        %v1929 = vpack.c.b16 %v1743, %v1741
        %v1930 = vpack.c.b16 %v1744, %v1742
        %v1931 = vpack.c.b16 %v1747, %v1745
        %v1932 = vpack.c.b16 %v1748, %v1746
        %v1933 = vpack.c.b16 %v1751, %v1749
        %v1934 = vpack.c.b16 %v1752, %v1750
        %v1935 = vpack.c.b16 %v1755, %v1753
        %v1936 = vpack.c.b16 %v1756, %v1754
        %v1937 = vpack.c.b16 %v1759, %v1757
        %v1938 = vpack.c.b16 %v1760, %v1758
        %v1939 = vpack.c.b16 %v1763, %v1761
        %v1940 = vpack.c.b16 %v1764, %v1762
        %v1941 = vpack.c.b16 %v1767, %v1765
        %v1942 = vpack.c.b16 %v1768, %v1766
        %v1943 = vpack.c.b16 %v1771, %v1769
        %v1944 = vpack.c.b16 %v1772, %v1770
        %v1945 = vpack.c.b16 %v1775, %v1773
        %v1946 = vpack.c.b16 %v1776, %v1774
        %v1947 = vpack.c.b16 %v1779, %v1777
        %v1948 = vpack.c.b16 %v1780, %v1778
        %v1949 = vpack.c.b16 %v1783, %v1781
        %v1950 = vpack.c.b16 %v1784, %v1782
        %v1951 = vpack.c.b16 %v1787, %v1785
        %v1952 = vpack.c.b16 %v1788, %v1786
        %v1953 = vpack.c.b16 %v1791, %v1789
        %v1954 = vpack.c.b16 %v1792, %v1790
        %v1955 = vpack.c.b16 %v1795, %v1793
        %v1956 = vpack.c.b16 %v1796, %v1794
        %v1957 = vpack.c.b16 %v1799, %v1797
        %v1958 = vpack.c.b16 %v1800, %v1798
        %v1959 = vpack.c.b16 %v1803, %v1801
        %v1960 = vpack.c.b16 %v1804, %v1802
        %v1961 = vpack.c.b16 %v1807, %v1805
        %v1962 = vpack.c.b16 %v1808, %v1806
        %v1963 = vpack.c.b16 %v1811, %v1809
        %v1964 = vpack.c.b16 %v1812, %v1810
        %v1965 = vpack.c.b16 %v1815, %v1813
        %v1966 = vpack.c.b16 %v1816, %v1814
        %v1967 = vpack.c.b16 %v1819, %v1817
        %v1968 = vpack.c.b16 %v1820, %v1818
        %v1969 = vpack.c.b16 %v1823, %v1821
        %v1970 = vpack.c.b16 %v1824, %v1822
        %v1971 = vpack.c.b16 %v1827, %v1825
        %v1972 = vpack.c.b16 %v1828, %v1826
        %v1973 = vpack.c.b16 %v1831, %v1829
        %v1974 = vpack.c.b16 %v1832, %v1830
        %v1975 = vpack.c.b16 %v1835, %v1833
        %v1976 = vpack.c.b16 %v1836, %v1834
        %v1977 = vpack.c.b16 %v1839, %v1837
        %v1978 = vpack.c.b16 %v1840, %v1838
        %v1979 = vpack.c.b16 %v1843, %v1841
        %v1980 = vpack.c.b16 %v1844, %v1842
        %v1981 = vpack.c.b16 %v1847, %v1845
        %v1982 = vpack.c.b16 %v1848, %v1846
        %v1983 = vpack.c.b16 %v1851, %v1849
        %v1984 = vpack.c.b16 %v1852, %v1850
        %v1985 = vpack.c.b16 %v1855, %v1853
        %v1986 = vpack.c.b16 %v1856, %v1854
        %v1987 = vpack.c.b16 %v1859, %v1857
        %v1988 = vpack.c.b16 %v1860, %v1858
        %2117 = vmatprep.subr.bf16.mxu0 %v1862
        %2118 = vmatpush1.bf16.msra.mxu0 %v1861
        %2119 = vmatprep.subr.bf16.mxu0 %v1864
        %2120 = vmatpush1.bf16.msra.mxu0 %v1863
        %2121 = vmatprep.subr.bf16.mxu0 %v1866
        %2122 = vmatpush1.bf16.msra.mxu0 %v1865
        %2123 = vmatprep.subr.bf16.mxu0 %v1868
        %2124 = vmatpush1.bf16.msra.mxu0 %v1867
        %2125 = vmatprep.subr.bf16.mxu0 %v1870
        %2126 = vmatpush1.bf16.msra.mxu0 %v1869
        %2127 = vmatprep.subr.bf16.mxu0 %v1872
        %2128 = vmatpush1.bf16.msra.mxu0 %v1871
        %2129 = vmatprep.subr.bf16.mxu0 %v1874
        %2130 = vmatpush1.bf16.msra.mxu0 %v1873
        %2131 = vmatprep.subr.bf16.mxu0 %v1876
        %2132 = vmatpush1.bf16.msra.mxu0 %v1875
        %2133 = vmatprep.subr.bf16.mxu0 %v1878
        %2134 = vmatpush1.bf16.msra.mxu0 %v1877
        %2135 = vmatprep.subr.bf16.mxu0 %v1880
        %2136 = vmatpush1.bf16.msra.mxu0 %v1879
        %2137 = vmatprep.subr.bf16.mxu0 %v1882
        %2138 = vmatpush1.bf16.msra.mxu0 %v1881
        %2139 = vmatprep.subr.bf16.mxu0 %v1884
        %2140 = vmatpush1.bf16.msra.mxu0 %v1883
        %2141 = vmatprep.subr.bf16.mxu0 %v1886
        %2142 = vmatpush1.bf16.msra.mxu0 %v1885
        %2143 = vmatprep.subr.bf16.mxu0 %v1888
        %2144 = vmatpush1.bf16.msra.mxu0 %v1887
        %2145 = vmatprep.subr.bf16.mxu0 %v1890
        %2146 = vmatpush1.bf16.msra.mxu0 %v1889
        %2147 = vmatprep.subr.bf16.mxu0 %v1892
        %2148 = vmatpush1.bf16.msra.mxu0 %v1891
        %2149 = vmatprep.mubr.bf16.mxu0 %v1462
        %2150 = vmatmul.mubr.bf16.gmra.mrb[0].mxu0 %v1461
        %v2151 = vpop.f32.mrb[0].mxu0
        %v2152 = vadd.f32 %v1443, %v2151
        %v2153 = vpop.f32.mrb[0].mxu0
        %v2154 = vadd.f32 %v1445, %v2153
        %v2155 = vpop.f32.mrb[0].mxu0
        %v2156 = vpop.f32.mrb[0].mxu0
        %2157 = vdwg.mxu0
        %2158 = vmatprep.subr.bf16.mxu0 %v1894
        %2159 = vmatpush1.bf16.msra.mxu0 %v1893
        %2160 = vmatprep.subr.bf16.mxu0 %v1896
        %2161 = vmatpush1.bf16.msra.mxu0 %v1895
        %2162 = vmatprep.subr.bf16.mxu0 %v1898
        %2163 = vmatpush1.bf16.msra.mxu0 %v1897
        %2164 = vmatprep.subr.bf16.mxu0 %v1900
        %2165 = vmatpush1.bf16.msra.mxu0 %v1899
        %2166 = vmatprep.subr.bf16.mxu0 %v1902
        %2167 = vmatpush1.bf16.msra.mxu0 %v1901
        %2168 = vmatprep.subr.bf16.mxu0 %v1904
        %2169 = vmatpush1.bf16.msra.mxu0 %v1903
        %2170 = vmatprep.subr.bf16.mxu0 %v1906
        %2171 = vmatpush1.bf16.msra.mxu0 %v1905
        %2172 = vmatprep.subr.bf16.mxu0 %v1908
        %2173 = vmatpush1.bf16.msra.mxu0 %v1907
        %2174 = vmatprep.subr.bf16.mxu0 %v1910
        %2175 = vmatpush1.bf16.msra.mxu0 %v1909
        %2176 = vmatprep.subr.bf16.mxu0 %v1912
        %2177 = vmatpush1.bf16.msra.mxu0 %v1911
        %2178 = vmatprep.subr.bf16.mxu0 %v1914
        %2179 = vmatpush1.bf16.msra.mxu0 %v1913
        %2180 = vmatprep.subr.bf16.mxu0 %v1916
        %2181 = vmatpush1.bf16.msra.mxu0 %v1915
        %2182 = vmatprep.subr.bf16.mxu0 %v1918
        %2183 = vmatpush1.bf16.msra.mxu0 %v1917
        %2184 = vmatprep.subr.bf16.mxu0 %v1920
        %2185 = vmatpush1.bf16.msra.mxu0 %v1919
        %2186 = vmatprep.subr.bf16.mxu0 %v1922
        %2187 = vmatpush1.bf16.msra.mxu0 %v1921
        %2188 = vmatprep.subr.bf16.mxu0 %v1924
        %2189 = vmatpush1.bf16.msra.mxu0 %v1923
        %2190 = vmatprep.mubr.bf16.mxu0 %v1464
        %2191 = vmatmul.mubr.bf16.gmra.mrb[0].mxu0 %v1463
        %v2192 = vpop.f32.mrb[0].mxu0
        %v2193 = vadd.f32 %v2152, %v2192
        %v2194 = vpop.f32.mrb[0].mxu0
        %v2195 = vadd.f32 %v2154, %v2194
        %v2196 = vpop.f32.mrb[0].mxu0
        %v2197 = vpop.f32.mrb[0].mxu0
        %2198 = vdwg.mxu0
        %2199 = vmatprep.subr.bf16.mxu0 %v1926
        %2200 = vmatpush1.bf16.msra.mxu0 %v1925
        %2201 = vmatprep.subr.bf16.mxu0 %v1928
        %2202 = vmatpush1.bf16.msra.mxu0 %v1927
        %2203 = vmatprep.subr.bf16.mxu0 %v1930
        %2204 = vmatpush1.bf16.msra.mxu0 %v1929
        %2205 = vmatprep.subr.bf16.mxu0 %v1932
        %2206 = vmatpush1.bf16.msra.mxu0 %v1931
        %2207 = vmatprep.subr.bf16.mxu0 %v1934
        %2208 = vmatpush1.bf16.msra.mxu0 %v1933
        %2209 = vmatprep.subr.bf16.mxu0 %v1936
        %2210 = vmatpush1.bf16.msra.mxu0 %v1935
        %2211 = vmatprep.subr.bf16.mxu0 %v1938
        %2212 = vmatpush1.bf16.msra.mxu0 %v1937
        %2213 = vmatprep.subr.bf16.mxu0 %v1940
        %2214 = vmatpush1.bf16.msra.mxu0 %v1939
        %2215 = vmatprep.subr.bf16.mxu0 %v1942
        %2216 = vmatpush1.bf16.msra.mxu0 %v1941
        %2217 = vmatprep.subr.bf16.mxu0 %v1944
        %2218 = vmatpush1.bf16.msra.mxu0 %v1943
        %2219 = vmatprep.subr.bf16.mxu0 %v1946
        %2220 = vmatpush1.bf16.msra.mxu0 %v1945
        %2221 = vmatprep.subr.bf16.mxu0 %v1948
        %2222 = vmatpush1.bf16.msra.mxu0 %v1947
        %2223 = vmatprep.subr.bf16.mxu0 %v1950
        %2224 = vmatpush1.bf16.msra.mxu0 %v1949
        %2225 = vmatprep.subr.bf16.mxu0 %v1952
        %2226 = vmatpush1.bf16.msra.mxu0 %v1951
        %2227 = vmatprep.subr.bf16.mxu0 %v1954
        %2228 = vmatpush1.bf16.msra.mxu0 %v1953
        %2229 = vmatprep.subr.bf16.mxu0 %v1956
        %2230 = vmatpush1.bf16.msra.mxu0 %v1955
        %2231 = vmatprep.mubr.bf16.mxu0 %v1466
        %2232 = vmatmul.mubr.bf16.gmra.mrb[0].mxu0 %v1465
        %v2233 = vpop.f32.mrb[0].mxu0
        %v2234 = vadd.f32 %v2193, %v2233
        %v2235 = vpop.f32.mrb[0].mxu0
        %v2236 = vadd.f32 %v2195, %v2235
        %v2237 = vpop.f32.mrb[0].mxu0
        %v2238 = vpop.f32.mrb[0].mxu0
        %2239 = vdwg.mxu0
        %2240 = vmatprep.subr.bf16.mxu0 %v1958
        %2241 = vmatpush1.bf16.msra.mxu0 %v1957
        %2242 = vmatprep.subr.bf16.mxu0 %v1960
        %2243 = vmatpush1.bf16.msra.mxu0 %v1959
        %2244 = vmatprep.subr.bf16.mxu0 %v1962
        %2245 = vmatpush1.bf16.msra.mxu0 %v1961
        %2246 = vmatprep.subr.bf16.mxu0 %v1964
        %2247 = vmatpush1.bf16.msra.mxu0 %v1963
        %2248 = vmatprep.subr.bf16.mxu0 %v1966
        %2249 = vmatpush1.bf16.msra.mxu0 %v1965
        %2250 = vmatprep.subr.bf16.mxu0 %v1968
        %2251 = vmatpush1.bf16.msra.mxu0 %v1967
        %2252 = vmatprep.subr.bf16.mxu0 %v1970
        %2253 = vmatpush1.bf16.msra.mxu0 %v1969
        %2254 = vmatprep.subr.bf16.mxu0 %v1972
        %2255 = vmatpush1.bf16.msra.mxu0 %v1971
        %2256 = vmatprep.subr.bf16.mxu0 %v1974
        %2257 = vmatpush1.bf16.msra.mxu0 %v1973
        %2258 = vmatprep.subr.bf16.mxu0 %v1976
        %2259 = vmatpush1.bf16.msra.mxu0 %v1975
        %2260 = vmatprep.subr.bf16.mxu0 %v1978
        %2261 = vmatpush1.bf16.msra.mxu0 %v1977
        %2262 = vmatprep.subr.bf16.mxu0 %v1980
        %2263 = vmatpush1.bf16.msra.mxu0 %v1979
        %2264 = vmatprep.subr.bf16.mxu0 %v1982
        %2265 = vmatpush1.bf16.msra.mxu0 %v1981
        %2266 = vmatprep.subr.bf16.mxu0 %v1984
        %2267 = vmatpush1.bf16.msra.mxu0 %v1983
        %2268 = vmatprep.subr.bf16.mxu0 %v1986
        %2269 = vmatpush1.bf16.msra.mxu0 %v1985
        %2270 = vmatprep.subr.bf16.mxu0 %v1988
        %2271 = vmatpush1.bf16.msra.mxu0 %v1987
        %2272 = vmatprep.mubr.bf16.mxu0 %v1468
        %2273 = vmatmul.mubr.bf16.gmra.mrb[0].mxu0 %v1467
        %v2274 = vpop.f32.mrb[0].mxu0
        %v2275 = vadd.f32 %v2234, %v2274
        %v2276 = vpop.f32.mrb[0].mxu0
        %v2277 = vadd.f32 %v2236, %v2276
        %v2278 = vpop.f32.mrb[0].mxu0
        %v2279 = vpop.f32.mrb[0].mxu0
        %2280 = vdwg.mxu0
        %v2281 = vld [vmem:[%s4] sm:$0x3]
        %v2283 = vlaneseq
        %v2284 = vshrl.u32 %v2283, 7
        %v2285 = vsub.s32 0, %v2284
        %v2286 = vrot.slane %v2281, %v2285
        %v2287 = vlaneseq
        %v2288 = vshrl.u32 %v2287, 7
        %v2289 = vsub.s32 1, %v2288
        %v2290 = vrot.slane %v2281, %v2289
        %v2293 = vadd.f32 %v2275, %v2286
        %v2294 = vadd.f32 %v2277, %v2290
        %v2295 = vmax.f32 %v2293, 0.0
        %v2296 = vmax.f32 %v2294, 0.0
        %v2297 = vrot.slane %v2295, 4
        %v2298 = vadd.f32 %v2295, %v2297
        %v2299 = vrot.slane %v2298, 2
        %v2300 = vadd.f32 %v2298, %v2299
        %v2301 = vrot.slane %v2300, 1
        %v2302 = vadd.f32 %v2300, %v2301
        %v2303 = vrot.slane %v2296, 4
        %v2304 = vadd.f32 %v2296, %v2303
        %v2305 = vrot.slane %v2304, 2
        %v2306 = vadd.f32 %v2304, %v2305
        %v2307 = vrot.slane %v2306, 1
        %v2308 = vadd.f32 %v2306, %v2307
        %v2309 = vrcp.pop 8.0
        %v2310 = vmul.f32 %v2302, %v2309
        %v2311 = vmul.f32 %v2308, %v2309
        %v2312 = vld [vmem:[%s5] sm:$0xff]
        %v2313 = vld [vmem:[%s5 + $0x8] sm:$0xff]
        %v2314 = vld [vmem:[%s5 + $0x10] sm:$0xff]
        %v2315 = vld [vmem:[%s5 + $0x18] sm:$0xff]
        %v2316 = vld [vmem:[%s5 + $0x20] sm:$0xff]
        %v2317 = vld [vmem:[%s5 + $0x28] sm:$0xff]
        %v2318 = vld [vmem:[%s5 + $0x30] sm:$0xff]
        %v2319 = vld [vmem:[%s5 + $0x38] sm:$0xff]
        %v2320 = vld [vmem:[%s5 + $0x40] sm:$0xff]
        %v2321 = vld [vmem:[%s5 + $0x48] sm:$0xff]
        %v2322 = vld [vmem:[%s5 + $0x50] sm:$0xff]
        %v2323 = vld [vmem:[%s5 + $0x58] sm:$0xff]
        %v2324 = vld [vmem:[%s5 + $0x60] sm:$0xff]
        %v2325 = vld [vmem:[%s5 + $0x68] sm:$0xff]
        %v2326 = vld [vmem:[%s5 + $0x70] sm:$0xff]
        %v2327 = vld [vmem:[%s5 + $0x78] sm:$0xff]
        %v2328 = vld [vmem:[%s5 + $0x80] sm:$0xff]
        %v2329 = vld [vmem:[%s5 + $0x88] sm:$0xff]
        %v2330 = vld [vmem:[%s5 + $0x90] sm:$0xff]
        %v2331 = vld [vmem:[%s5 + $0x98] sm:$0xff]
        %v2332 = vld [vmem:[%s5 + $0xa0] sm:$0xff]
        %v2333 = vld [vmem:[%s5 + $0xa8] sm:$0xff]
        %v2334 = vld [vmem:[%s5 + $0xb0] sm:$0xff]
        %v2335 = vld [vmem:[%s5 + $0xb8] sm:$0xff]
        %v2336 = vld [vmem:[%s5 + $0xc0] sm:$0xff]
        %v2337 = vld [vmem:[%s5 + $0xc8] sm:$0xff]
        %v2338 = vld [vmem:[%s5 + $0xd0] sm:$0xff]
        %v2339 = vld [vmem:[%s5 + $0xd8] sm:$0xff]
        %v2340 = vld [vmem:[%s5 + $0xe0] sm:$0xff]
        %v2341 = vld [vmem:[%s5 + $0xe8] sm:$0xff]
        %v2342 = vld [vmem:[%s5 + $0xf0] sm:$0xff]
        %v2343 = vld [vmem:[%s5 + $0xf8] sm:$0xff]
        %v2344 = vld [vmem:[%s6] sm:$0x1]
        %2345 = vmatprep.subr.mxu0 0.0
        %2346 = vmatpush1.msra.mxu0 %v2312
        %2347 = vmatprep.subr.mxu0 0.0
        %2348 = vmatpush1.msra.mxu0 %v2313
        %2349 = vmatprep.subr.mxu0 0.0
        %2350 = vmatpush1.msra.mxu0 %v2314
        %2351 = vmatprep.subr.mxu0 0.0
        %2352 = vmatpush1.msra.mxu0 %v2315
        %2353 = vmatprep.subr.mxu0 0.0
        %2354 = vmatpush1.msra.mxu0 %v2316
        %2355 = vmatprep.subr.mxu0 0.0
        %2356 = vmatpush1.msra.mxu0 %v2317
        %2357 = vmatprep.subr.mxu0 0.0
        %2358 = vmatpush1.msra.mxu0 %v2318
        %2359 = vmatprep.subr.mxu0 0.0
        %2360 = vmatpush1.msra.mxu0 %v2319
        %2361 = vmatprep.subr.mxu0 0.0
        %2362 = vmatpush1.msra.mxu0 %v2320
        %2363 = vmatprep.subr.mxu0 0.0
        %2364 = vmatpush1.msra.mxu0 %v2321
        %2365 = vmatprep.subr.mxu0 0.0
        %2366 = vmatpush1.msra.mxu0 %v2322
        %2367 = vmatprep.subr.mxu0 0.0
        %2368 = vmatpush1.msra.mxu0 %v2323
        %2369 = vmatprep.subr.mxu0 0.0
        %2370 = vmatpush1.msra.mxu0 %v2324
        %2371 = vmatprep.subr.mxu0 0.0
        %2372 = vmatpush1.msra.mxu0 %v2325
        %2373 = vmatprep.subr.mxu0 0.0
        %2374 = vmatpush1.msra.mxu0 %v2326
        %2375 = vmatprep.subr.mxu0 0.0
        %2376 = vmatpush1.msra.mxu0 %v2327
        %2377 = vmatprep.subr.mxu0 0.0
        %2378 = vmatpush1.msra.mxu0 %v2328
        %2379 = vmatprep.subr.mxu0 0.0
        %2380 = vmatpush1.msra.mxu0 %v2329
        %2381 = vmatprep.subr.mxu0 0.0
        %2382 = vmatpush1.msra.mxu0 %v2330
        %2383 = vmatprep.subr.mxu0 0.0
        %2384 = vmatpush1.msra.mxu0 %v2331
        %2385 = vmatprep.subr.mxu0 0.0
        %2386 = vmatpush1.msra.mxu0 %v2332
        %2387 = vmatprep.subr.mxu0 0.0
        %2388 = vmatpush1.msra.mxu0 %v2333
        %2389 = vmatprep.subr.mxu0 0.0
        %2390 = vmatpush1.msra.mxu0 %v2334
        %2391 = vmatprep.subr.mxu0 0.0
        %2392 = vmatpush1.msra.mxu0 %v2335
        %2393 = vmatprep.subr.mxu0 0.0
        %2394 = vmatpush1.msra.mxu0 %v2336
        %2395 = vmatprep.subr.mxu0 0.0
        %2396 = vmatpush1.msra.mxu0 %v2337
        %2397 = vmatprep.subr.mxu0 0.0
        %2398 = vmatpush1.msra.mxu0 %v2338
        %2399 = vmatprep.subr.mxu0 0.0
        %2400 = vmatpush1.msra.mxu0 %v2339
        %2401 = vmatprep.subr.mxu0 0.0
        %2402 = vmatpush1.msra.mxu0 %v2340
        %2403 = vmatprep.subr.mxu0 0.0
        %2404 = vmatpush1.msra.mxu0 %v2341
        %2405 = vmatprep.subr.mxu0 0.0
        %2406 = vmatpush1.msra.mxu0 %v2342
        %2407 = vmatprep.subr.mxu0 0.0
        %2408 = vmatpush1.msra.mxu0 %v2343
        %2409 = vmatprep.mubr.f32.mxu0 %v2311
        %2410 = vmatmul.mubr.f32.gmra.mrb[0].mxu0 %v2310
        %v2411 = vpop.f32.mrb[0].mxu0
        %v2412 = vadd.f32 %v2344, %v2411
        %v2413 = vpop.f32.mrb[0].mxu0
        %2414 = vdwg.mxu0
        %v2415 = vld [vmem:[%s7] sm:$0x1]
        %v2416 = vxor.u32 %v2412, 2147483648
        %v2417 = vmul.f32 %v2416, 1.442695
        %v2418 = vpow.pop %v2417
        %v2419 = vadd.f32 %v2418, 1.0
        %v2420 = vrcp.pop %v2419
        %v2421 = vmul.f32 1.0, %v2420
        %v2422 = vsub.f32 %v2421, %v2412
        %v2423 = vmul.f32 %v2415, %v2422
        %v2424 = vadd.f32 %v2412, %v2423
        %vm2425 = vcmask 90112
        %2426 = vst.msk [vmem:[%s342] sm:$0x1] %vm2425, %v2424
        %s2427 = sand.u32 %s210, 1
        %s2428 = scalar_lea.sflag [#allocation4], %s2427
        %s2429 = sand.u32 %s210, 1
        %s2430 = scalar_lea.vmem [#allocation7], %s2429
        // Predicated region
        $region61: #{tpu_custom_call.1} parent=51 // pred_check
          %p2431 = pneg %p220
        $region62: #{tpu_custom_call.1} parent=51 // pred_check_branch
          %2433 = sbr.rel (%p2431) target = $region64
        $region63: #{tpu_custom_call.1} parent=51 // pred_region
          %s2435 = ssub.s32 16, 16
          %2436 = vsyncadd %s2428, %s2435
          %s2437 = smul.addr %s24, 16
          %s2438 = scalar_lea.hbm %s8, %s2437
          %s2440 = sshll.u32 %s2430, 4
          %s2441 = int_to_ptr.vmem [resolvable:$true] %s2440
          %2443 = dma.vmem_to_hbm [thread:$0]  %s2441, 16, %s2438, %s2428
        $region64: #{tpu_custom_call.1} parent=51 // pred_fallthru
          _
      $region52: #{tpu_custom_call.1} parent=5 // pred_fallthru
        _
      %p2444 = scmp.le.s32.totalorder 2, %s19
      // Predicated region
      $region65: #{tpu_custom_call.1} parent=5 // pred_check
        %p2445 = pneg %p2444
      $region66: #{tpu_custom_call.1} parent=5 // pred_check_branch
        %2447 = sbr.rel (%p2445) target = $region68
      $region67: #{tpu_custom_call.1} parent=5 // pred_region
        %s2448 = ssub.s32 %s19, 2
        // Predicated region
        $region69: #{tpu_custom_call.1} parent=67 // pred_check
          %p2449 = pneg %p226
        $region70: #{tpu_custom_call.1} parent=67 // pred_check_branch
          %2451 = sbr.rel (%p2449) target = $region72
        $region71: #{tpu_custom_call.1} parent=67 // pred_region
          %s2452 = sand.u32 %s211, 1
          %s2453 = scalar_lea.sflag [#allocation4], %s2452
          %s2454 = sand.u32 %s211, 1
          %s2455 = scalar_lea.vmem [#allocation7], %s2454
          %2456 = dma.done %s2453, 16
        $region72: #{tpu_custom_call.1} parent=67 // pred_fallthru
          _
      $region68: #{tpu_custom_call.1} parent=5 // pred_fallthru
        _
    $region6: #{tpu_custom_call.1} parent=1 // loop_footer
      %s23 = sadd.s32 1, %s19
    $region7: #{tpu_custom_call.1} parent=1 // loop_footer_branch
      %18 = sbr.rel target = $region3
    $region8: #{tpu_custom_call.1} parent=1 // loop_exit
      _
    %2457 = vsyncpa [#allocation3], 1
    %s2458 = scalar_lea.sflag [#allocation3], 1
    %2459 = vsyncpa %s2458, 1
    %2460 = vsyncpa [#allocation6], 1
    %2461 = vsyncpa [#allocation4], 1
    %s2462 = scalar_lea.sflag [#allocation4], 1
    %2463 = vsyncpa %s2462, 1

</llo_original>
